<compile_context>
chip_gen: v5e
topology: v5e:2x2
jax: 0.10.0
libtpu: 0.0.40
codegen_flags: <defaults>
</compile_context>

<pallas_src>
import jax
import jax.numpy as jnp
import numpy as np
from jax.experimental import pallas as pl
from jax.experimental.pallas import tpu as pltpu

_HP = jax.lax.Precision.HIGHEST


def _cdiv(a, b):
    return -(-a // b)


def _round_up(x, m):
    return (x + m - 1) // m * m


def cnn7_kernel(x_ref, m1_ref, b1_ref, m2_ref, b2_ref, m3_ref, b3_ref,
                w4_ref, b4_ref, alpha_ref, o_ref):
    # x_ref:  (TN, 49)   flattened 7x7 input tile (f32)
    # m2_ref: bf16; all other weights/biases f32
    # alpha_ref: SMEM (3,) PReLU slopes
    # o_ref:  (1, TN)    lane-dense transposed output row
    a1 = alpha_ref[0]
    a2 = alpha_ref[1]
    a3 = alpha_ref[2]

    x = x_ref[...]                                                    # (TN, 49)

    # conv1 (folded) + PReLU1 -- kept in f32 (only ~11% of FLOPs).
    h1 = jnp.dot(x, m1_ref[...],
                 preferred_element_type=jnp.float32) + b1_ref[...]   # (TN, 576)
    h1 = jnp.where(h1 >= 0, h1, a1 * h1)

    # avgpool1 o conv2 (folded) + PReLU2 -- dominant matmul: bf16 MXU inputs,
    # f32 accumulation.
    h2 = jnp.dot(h1.astype(jnp.bfloat16), m2_ref[...],
                 preferred_element_type=jnp.float32) + b2_ref[...]   # (TN, 384)
    h2 = jnp.where(h2 >= 0, h2, a2 * h2)

    # Dropout(p=0.3): eval-mode identity.
    # TODO(synk): train-mode stochastic dropout not implemented (inference semantics).

    # avgpool2 o flatten o linear1 (folded) + PReLU3
    h3 = jnp.dot(h2, m3_ref[...],
                 preferred_element_type=jnp.float32) + b3_ref[...]   # (TN, 8)
    h3 = jnp.where(h3 >= 0, h3, a3 * h3)

    # linear2 (8->1), emitted transposed so the store is a lane-dense (1, TN)
    # row (full-lane vst) instead of a 1-lane masked column store.
    y = jax.lax.dot_general(w4_ref[...], h3,
                            dimension_numbers=(((1,), (1,)), ((), ())),
                            preferred_element_type=jnp.float32)      # (1, TN)
    o_ref[...] = y + b4_ref[...]


def _fold_matrices(params):
    """Fold the conv/pool/linear chain into dense matrices (host/XLA side)."""
    (w1, b1, a1, w2, b2, a2, lw1, lb1, a3, lw2, lb2) = params
    dn = ('NCHW', 'OIHW', 'NCHW')

    # conv1 as a (49 -> 576) matrix: push the canonical basis of the flattened
    # 7x7 input through the conv (preserves the NCHW flatten ordering).
    eye49 = jnp.eye(49, dtype=jnp.float32).reshape(49, 1, 7, 7)
    m1 = jax.lax.conv_general_dilated(eye49, w1, (1, 1), 'VALID',
                                      dimension_numbers=dn, precision=_HP)
    m1 = m1.reshape(49, 16 * 6 * 6)                                    # (49, 576)
    b1v = jnp.broadcast_to(b1.reshape(16, 1, 1), (16, 6, 6)).reshape(1, 576)

    # avgpool1 o conv2 as a (576 -> 384) matrix; keep only the 2x3 window of
    # the conv2 output that avgpool2 consumes (rows 0:2, cols 0:3).
    eye576 = jnp.eye(576, dtype=jnp.float32).reshape(576, 16, 6, 6)
    p = jax.lax.reduce_window(eye576, jnp.float32(0), jax.lax.add,
                              (1, 1, 3, 3), (1, 1, 1, 1), 'VALID') / 9.0
    c2 = jax.lax.conv_general_dilated(p, w2, (1, 1), 'VALID',
                                      dimension_numbers=dn, precision=_HP)
    m2 = c2[:, :, 0:2, 0:3].reshape(576, 64 * 2 * 3)                   # (576, 384)
    m2 = m2.astype(jnp.bfloat16)                                       # bf16 MXU path
    b2v = jnp.broadcast_to(b2.reshape(64, 1, 1), (64, 2, 3)).reshape(1, 384)

    # avgpool2(2x3) o flatten o linear1 as a (384 -> 8) matrix.
    pool = jnp.broadcast_to((jnp.eye(64, dtype=jnp.float32) / 6.0)[:, None, None, :],
                            (64, 2, 3, 64)).reshape(384, 64)
    m3 = jnp.dot(pool, lw1.T, precision=_HP)                           # (384, 8)
    b3v = lb1.reshape(1, 8)

    w4 = lw2.reshape(1, 8)                                             # linear2
    b4 = lb2.reshape(1, 1)
    alphas = jnp.stack([a1, a2, a3]).astype(jnp.float32)               # (3,)
    return m1, b1v, m2, b2v, m3, b3v, w4, b4, alphas


def cnn7_forward(x_nchw, params, *, tile_n=2048):
    """Forward pass matching CNN7Model.forward (eval mode). x_nchw: (N,1,7,7)."""
    n = x_nchw.shape[0]
    x_flat = x_nchw.reshape(n, 49).astype(jnp.float32)                 # lane-dense input
    m1, b1v, m2, b2v, m3, b3v, w4, b4, alphas = _fold_matrices(params)

    # Batch tile: multiple of 128 (lane-dense (1, tn) output row), capped so
    # the grid has >= 2 steps whenever possible (v7x megacore sharding), and
    # no larger than tile_n (activation temporaries ~16 MiB at tn=2048, well
    # inside the 48 MiB VMEM limit on every generation).
    tn = min(_round_up(max(tile_n, 128), 128),
             max(128, _round_up(_cdiv(n, 2), 128)))
    grid = _cdiv(n, tn)          # ragged last tile handled by Pallas

    flops = 2 * n * (49 * 576 + 576 * 384 + 384 * 8 + 8)
    weight_bytes = ((m1.size + b1v.size + b2v.size + m3.size + b3v.size
                     + w4.size + b4.size) * 4 + m2.size * 2 + alphas.size * 4)
    bytes_accessed = n * (49 * 4 + 4) + weight_bytes

    def _const(shape):
        # Whole-array block, same block every grid step -> stays VMEM-resident.
        return pl.BlockSpec(shape, lambda i: (0,) * len(shape))

    out = pl.pallas_call(
        cnn7_kernel,
        out_shape=jax.ShapeDtypeStruct((1, n), jnp.float32),
        grid=(grid,),
        in_specs=[
            pl.BlockSpec((tn, 49), lambda i: (i, 0)),                  # batch-tiled input
            _const((49, 576)), _const((1, 576)),                       # folded conv1
            _const((576, 384)), _const((1, 384)),                      # folded pool1 o conv2 (bf16 M2)
            _const((384, 8)), _const((1, 8)),                          # folded pool2 o linear1
            _const((1, 8)), _const((1, 1)),                            # linear2
            pl.BlockSpec(memory_space=pltpu.MemorySpace.SMEM),         # PReLU slopes
        ],
        out_specs=pl.BlockSpec((1, tn), lambda i: (0, i)),             # lane-dense row
        compiler_params=pltpu.CompilerParams(
            dimension_semantics=("parallel",),          # megacore on v7x
            vmem_limit_bytes=48 * 1024 * 1024,
        ),
        cost_estimate=pl.CostEstimate(flops=int(flops), transcendentals=0,
                                      bytes_accessed=int(bytes_accessed)),
    )(x_flat, m1, b1v, m2, b2v, m3, b3v, w4, b4, alphas)
    return out.reshape(n, 1)


def cnn7_forward_ref(x, params):
    """Pure-JAX reference matching the PyTorch forward (NCHW, op by op)."""
    (w1, b1, a1, w2, b2, a2, lw1, lb1, a3, lw2, lb2) = params
    dn = ('NCHW', 'OIHW', 'NCHW')
    out = jax.lax.conv_general_dilated(x, w1, (1, 1), 'VALID',
                                       dimension_numbers=dn, precision=_HP)
    out = out + b1.reshape(1, -1, 1, 1)
    out = jnp.where(out >= 0, out, a1 * out)
    out = jax.lax.reduce_window(out, jnp.float32(0), jax.lax.add,
                                (1, 1, 3, 3), (1, 1, 1, 1), 'VALID') / 9.0
    out = jax.lax.conv_general_dilated(out, w2, (1, 1), 'VALID',
                                       dimension_numbers=dn, precision=_HP)
    out = out + b2.reshape(1, -1, 1, 1)
    out = jnp.where(out >= 0, out, a2 * out)
    out = jax.lax.reduce_window(out, jnp.float32(0), jax.lax.add,
                                (1, 1, 2, 3), (1, 1, 2, 3), 'VALID') / 6.0
    out = out.reshape(-1, 64)
    out = jnp.dot(out, lw1.T, precision=_HP) + lb1
    out = jnp.where(out >= 0, out, a3 * out)
    out = jnp.dot(out, lw2.T, precision=_HP) + lb2
    return out


def init_params(key):
    ks = jax.random.split(key, 8)

    def u(k, shape, fan_in):
        bound = 1.0 / np.sqrt(fan_in)
        return jax.random.uniform(k, shape, jnp.float32, -bound, bound)

    w1 = u(ks[0], (16, 1, 2, 2), 4)     # Conv2d(1,16,k=2)
    b1 = u(ks[1], (16,), 4)
    w2 = u(ks[2], (64, 16, 2, 2), 64)   # Conv2d(16,64,k=2)
    b2 = u(ks[3], (64,), 64)
    lw1 = u(ks[4], (8, 64), 64)         # Linear(64,8)
    lb1 = u(ks[5], (8,), 64)
    lw2 = u(ks[6], (1, 8), 8)           # Linear(8,1)
    lb2 = u(ks[7], (1,), 8)
    a1 = jnp.float32(0.25)              # PReLU default slopes
    a2 = jnp.float32(0.25)
    a3 = jnp.float32(0.25)
    return (w1, b1, a1, w2, b2, a2, lw1, lb1, a3, lw2, lb2)


if __name__ == "__main__":
    key = jax.random.PRNGKey(0)
    kx, kp, kx2 = jax.random.split(key, 3)
    params = init_params(kp)

    # Small shape implied by the module: batch=2, 1 channel, 7x7 spatial (NCHW).
    x = jax.random.normal(kx, (2, 1, 7, 7), jnp.float32)
    y = jax.block_until_ready(cnn7_forward(x, params))
    y_ref = jax.block_until_ready(cnn7_forward_ref(x, params))
    np.testing.assert_allclose(np.asarray(y), np.asarray(y_ref), rtol=1e-3, atol=1e-3)

    # Exercise the multi-tile grid path with a ragged last tile.
    x2 = jax.random.normal(kx2, (300, 1, 7, 7), jnp.float32)
    y2_ref = jax.block_until_ready(cnn7_forward_ref(x2, params))
    y2 = jax.block_until_ready(cnn7_forward(x2, params, tile_n=128))   # grid = 3
    np.testing.assert_allclose(np.asarray(y2), np.asarray(y2_ref), rtol=1e-3, atol=1e-3)
    y3 = jax.block_until_ready(cnn7_forward(x2, params))               # grid = 2 (half-batch tiles)
    np.testing.assert_allclose(np.asarray(y3), np.asarray(y2_ref), rtol=1e-3, atol=1e-3)

    print("KERNEL_OK")
</pallas_src>

<mosaic_0001>
module attributes {stable_mosaic.version = 11 : i64} {
  func.func @cnn7_kernel(%arg0: i32, %arg1: memref<128x49xf32, #tpu.memory_space<vmem>>, %arg2: memref<49x576xf32, #tpu.memory_space<vmem>>, %arg3: memref<1x576xf32, #tpu.memory_space<vmem>>, %arg4: memref<576x384xbf16, #tpu.memory_space<vmem>>, %arg5: memref<1x384xf32, #tpu.memory_space<vmem>>, %arg6: memref<384x8xf32, #tpu.memory_space<vmem>>, %arg7: memref<1x8xf32, #tpu.memory_space<vmem>>, %arg8: memref<1x8xf32, #tpu.memory_space<vmem>>, %arg9: memref<1x1xf32, #tpu.memory_space<vmem>>, %arg10: memref<3xf32, #tpu.memory_space<smem>>, %arg11: memref<1x128xf32, #tpu.memory_space<vmem>>) attributes {dimension_semantics = [#tpu.dimension_semantics<parallel>], iteration_bounds = array<i64: 1>, scalar_prefetch = 0 : i64, scratch_operands = 0 : i64, tpu.core_type = #tpu.core_type<tc>, window_params = [{transform_indices = @transform_0, window_bounds = array<i64: 128, 49>}, {pipeline_mode = #tpu.pipeline_mode<synchronous>, transform_indices = @transform_1, window_bounds = array<i64: 49, 576>}, {pipeline_mode = #tpu.pipeline_mode<synchronous>, transform_indices = @transform_2, window_bounds = array<i64: 1, 576>}, {pipeline_mode = #tpu.pipeline_mode<synchronous>, transform_indices = @transform_3, window_bounds = array<i64: 576, 384>}, {pipeline_mode = #tpu.pipeline_mode<synchronous>, transform_indices = @transform_4, window_bounds = array<i64: 1, 384>}, {pipeline_mode = #tpu.pipeline_mode<synchronous>, transform_indices = @transform_5, window_bounds = array<i64: 384, 8>}, {pipeline_mode = #tpu.pipeline_mode<synchronous>, transform_indices = @transform_6, window_bounds = array<i64: 1, 8>}, {pipeline_mode = #tpu.pipeline_mode<synchronous>, transform_indices = @transform_7, window_bounds = array<i64: 1, 8>}, {pipeline_mode = #tpu.pipeline_mode<synchronous>, transform_indices = @transform_8, window_bounds = array<i64: 1, 1>}, {transform_indices = @transform_9, window_bounds = array<i64: 3>}, {transform_indices = @transform_10, window_bounds = array<i64: 1, 128>}]} {
    %c0 = arith.constant 0 : index
    %0 = memref.load %arg10[%c0] : memref<3xf32, #tpu.memory_space<smem>>
    %c1 = arith.constant 1 : index
    %1 = memref.load %arg10[%c1] : memref<3xf32, #tpu.memory_space<smem>>
    %c2 = arith.constant 2 : index
    %2 = memref.load %arg10[%c2] : memref<3xf32, #tpu.memory_space<smem>>
    %c0_0 = arith.constant 0 : index
    %c0_1 = arith.constant 0 : index
    %3 = vector.load %arg1[%c0_0, %c0_1] : memref<128x49xf32, #tpu.memory_space<vmem>>, vector<128x49xf32>
    %c0_2 = arith.constant 0 : index
    %c0_3 = arith.constant 0 : index
    %4 = vector.load %arg2[%c0_2, %c0_3] : memref<49x576xf32, #tpu.memory_space<vmem>>, vector<49x576xf32>
    %cst = arith.constant dense<0.000000e+00> : vector<128x576xf32>
    %5 = tpu.matmul %3, %4, %cst {dimension_numbers = #tpu.dot_dimension_numbers<[1], [0], [0], [1], [0, 0, 1, 1], [], []>} : vector<128x49xf32>, vector<49x576xf32>, vector<128x576xf32> -> vector<128x576xf32>
    %c0_4 = arith.constant 0 : index
    %c0_5 = arith.constant 0 : index
    %6 = vector.load %arg3[%c0_4, %c0_5] : memref<1x576xf32, #tpu.memory_space<vmem>>, vector<1x576xf32>
    %7 = vector.broadcast %6 : vector<1x576xf32> to vector<128x576xf32>
    %8 = arith.addf %5, %7 : vector<128x576xf32>
    %cst_6 = arith.constant 0.000000e+00 : f32
    %9 = vector.broadcast %cst_6 : f32 to vector<128x576xf32>
    %10 = arith.cmpf oge, %8, %9 : vector<128x576xf32>
    %11 = vector.broadcast %0 : f32 to vector<128x576xf32>
    %12 = arith.mulf %11, %8 : vector<128x576xf32>
    %13 = arith.select %10, %8, %12 : vector<128x576xi1>, vector<128x576xf32>
    %14 = arith.truncf %13 : vector<128x576xf32> to vector<128x576xbf16>
    %c0_7 = arith.constant 0 : index
    %c0_8 = arith.constant 0 : index
    %15 = vector.load %arg4[%c0_7, %c0_8] : memref<576x384xbf16, #tpu.memory_space<vmem>>, vector<576x384xbf16>
    %cst_9 = arith.constant dense<0.000000e+00> : vector<128x384xf32>
    %16 = tpu.matmul %14, %15, %cst_9 {dimension_numbers = #tpu.dot_dimension_numbers<[1], [0], [0], [1], [0, 0, 1, 1], [], []>} : vector<128x576xbf16>, vector<576x384xbf16>, vector<128x384xf32> -> vector<128x384xf32>
    %c0_10 = arith.constant 0 : index
    %c0_11 = arith.constant 0 : index
    %17 = vector.load %arg5[%c0_10, %c0_11] : memref<1x384xf32, #tpu.memory_space<vmem>>, vector<1x384xf32>
    %18 = vector.broadcast %17 : vector<1x384xf32> to vector<128x384xf32>
    %19 = arith.addf %16, %18 : vector<128x384xf32>
    %cst_12 = arith.constant 0.000000e+00 : f32
    %20 = vector.broadcast %cst_12 : f32 to vector<128x384xf32>
    %21 = arith.cmpf oge, %19, %20 : vector<128x384xf32>
    %22 = vector.broadcast %1 : f32 to vector<128x384xf32>
    %23 = arith.mulf %22, %19 : vector<128x384xf32>
    %24 = arith.select %21, %19, %23 : vector<128x384xi1>, vector<128x384xf32>
    %c0_13 = arith.constant 0 : index
    %c0_14 = arith.constant 0 : index
    %25 = vector.load %arg6[%c0_13, %c0_14] : memref<384x8xf32, #tpu.memory_space<vmem>>, vector<384x8xf32>
    %cst_15 = arith.constant dense<0.000000e+00> : vector<128x8xf32>
    %26 = tpu.matmul %24, %25, %cst_15 {dimension_numbers = #tpu.dot_dimension_numbers<[1], [0], [0], [1], [0, 0, 1, 1], [], []>} : vector<128x384xf32>, vector<384x8xf32>, vector<128x8xf32> -> vector<128x8xf32>
    %c0_16 = arith.constant 0 : index
    %c0_17 = arith.constant 0 : index
    %27 = vector.load %arg7[%c0_16, %c0_17] : memref<1x8xf32, #tpu.memory_space<vmem>>, vector<1x8xf32>
    %28 = vector.broadcast %27 : vector<1x8xf32> to vector<128x8xf32>
    %29 = arith.addf %26, %28 : vector<128x8xf32>
    %cst_18 = arith.constant 0.000000e+00 : f32
    %30 = vector.broadcast %cst_18 : f32 to vector<128x8xf32>
    %31 = arith.cmpf oge, %29, %30 : vector<128x8xf32>
    %32 = vector.broadcast %2 : f32 to vector<128x8xf32>
    %33 = arith.mulf %32, %29 : vector<128x8xf32>
    %34 = arith.select %31, %29, %33 : vector<128x8xi1>, vector<128x8xf32>
    %c0_19 = arith.constant 0 : index
    %c0_20 = arith.constant 0 : index
    %35 = vector.load %arg8[%c0_19, %c0_20] : memref<1x8xf32, #tpu.memory_space<vmem>>, vector<1x8xf32>
    %cst_21 = arith.constant dense<0.000000e+00> : vector<1x128xf32>
    %36 = tpu.matmul %35, %34, %cst_21 {dimension_numbers = #tpu.dot_dimension_numbers<[1], [1], [0], [0], [0, 0, 1, 0], [], []>} : vector<1x8xf32>, vector<128x8xf32>, vector<1x128xf32> -> vector<1x128xf32>
    %c0_22 = arith.constant 0 : index
    %c0_23 = arith.constant 0 : index
    %37 = vector.load %arg9[%c0_22, %c0_23] : memref<1x1xf32, #tpu.memory_space<vmem>>, vector<1x1xf32>
    %38 = vector.broadcast %37 : vector<1x1xf32> to vector<1x128xf32>
    %39 = arith.addf %36, %38 : vector<1x128xf32>
    %c0_24 = arith.constant 0 : index
    %c0_25 = arith.constant 0 : index
    %40 = vector.load %arg11[%c0_24, %c0_25] : memref<1x128xf32, #tpu.memory_space<vmem>>, vector<1x128xf32>
    tpu.vector_store %arg11[%c0_24, %c0_25], %39 {strides = array<i32>} : memref<1x128xf32, #tpu.memory_space<vmem>>, vector<1x128xf32>,
    return
  }
  func.func @transform_0(%arg0: i32) -> (i32, i32) {
    %c0_i32 = arith.constant 0 : i32
    %c0_i32_0 = arith.constant 0 : i32
    return %arg0, %c0_i32 : i32, i32
  }
  func.func @transform_1(%arg0: i32) -> (i32, i32) {
    %c0_i32 = arith.constant 0 : i32
    %c0_i32_0 = arith.constant 0 : i32
    %c0_i32_1 = arith.constant 0 : i32
    return %c0_i32, %c0_i32_0 : i32, i32
  }
  func.func @transform_2(%arg0: i32) -> (i32, i32) {
    %c0_i32 = arith.constant 0 : i32
    %c0_i32_0 = arith.constant 0 : i32
    %c0_i32_1 = arith.constant 0 : i32
    return %c0_i32, %c0_i32_0 : i32, i32
  }
  func.func @transform_3(%arg0: i32) -> (i32, i32) {
    %c0_i32 = arith.constant 0 : i32
    %c0_i32_0 = arith.constant 0 : i32
    %c0_i32_1 = arith.constant 0 : i32
    return %c0_i32, %c0_i32_0 : i32, i32
  }
  func.func @transform_4(%arg0: i32) -> (i32, i32) {
    %c0_i32 = arith.constant 0 : i32
    %c0_i32_0 = arith.constant 0 : i32
    %c0_i32_1 = arith.constant 0 : i32
    return %c0_i32, %c0_i32_0 : i32, i32
  }
  func.func @transform_5(%arg0: i32) -> (i32, i32) {
    %c0_i32 = arith.constant 0 : i32
    %c0_i32_0 = arith.constant 0 : i32
    %c0_i32_1 = arith.constant 0 : i32
    return %c0_i32, %c0_i32_0 : i32, i32
  }
  func.func @transform_6(%arg0: i32) -> (i32, i32) {
    %c0_i32 = arith.constant 0 : i32
    %c0_i32_0 = arith.constant 0 : i32
    %c0_i32_1 = arith.constant 0 : i32
    return %c0_i32, %c0_i32_0 : i32, i32
  }
  func.func @transform_7(%arg0: i32) -> (i32, i32) {
    %c0_i32 = arith.constant 0 : i32
    %c0_i32_0 = arith.constant 0 : i32
    %c0_i32_1 = arith.constant 0 : i32
    return %c0_i32, %c0_i32_0 : i32, i32
  }
  func.func @transform_8(%arg0: i32) -> (i32, i32) {
    %c0_i32 = arith.constant 0 : i32
    %c0_i32_0 = arith.constant 0 : i32
    %c0_i32_1 = arith.constant 0 : i32
    return %c0_i32, %c0_i32_0 : i32, i32
  }
  func.func @transform_9(%arg0: i32) -> i32 {
    %c0_i32 = arith.constant 0 : i32
    %c0_i32_0 = arith.constant 0 : i32
    return %c0_i32 : i32
  }
  func.func @transform_10(%arg0: i32) -> (i32, i32) {
    %c0_i32 = arith.constant 0 : i32
    %c0_i32_0 = arith.constant 0 : i32
    return %c0_i32, %arg0 : i32, i32
  }
}

</mosaic_0001>

<llo_original>
// kernel: tpu_custom_call.1
$region0: #{tpu_custom_call.1}
  #allocation0 [shape = 'u32[]', space=smem, size = 0x4, offset = 0x4, fixed_abs, tag = 'smem constant byte address 0x4 - core index']
  #allocation1 [shape = 'u32[72,128]{1,0:T(1,128)}', space=vmem, size = 0x9000, scoped, tag = 'internal scratch']
  #allocation2 [shape = 'f32[1,1]{1,0:T(1,128)S(1)}', space=vmem, size = 0x200, scoped, tag = 'scoped memory for tpu_custom_call.1']
  %s0 = inlined_call_operand.vmem [shape: f32[2,49], index: 0, kind: input, shape index: {}]
  %s1 = inlined_call_operand.vmem [shape: f32[49,576], index: 1, kind: input, shape index: {}]
  %s2 = inlined_call_operand.vmem [shape: f32[1,576], index: 2, kind: input, shape index: {}]
  %s3 = inlined_call_operand.hbm [shape: bf16[576,384], index: 3, kind: input, shape index: {}]
  %s4 = inlined_call_operand.vmem [shape: f32[1,384], index: 4, kind: input, shape index: {}]
  %s5 = inlined_call_operand.vmem [shape: f32[384,8], index: 5, kind: input, shape index: {}]
  %s6 = inlined_call_operand.vmem [shape: f32[1,8], index: 6, kind: input, shape index: {}]
  %s7 = inlined_call_operand.vmem [shape: f32[1,8], index: 7, kind: input, shape index: {}]
  %s8 = inlined_call_operand.<no memory space> [shape: f32[1,1], index: 8, kind: input, shape index: {}]
  %s9 = inlined_call_operand.vmem [shape: f32[3], index: 9, kind: input, shape index: {}]
  %s10 = inlined_call_operand.hbm [shape: f32[1,2], index: 10, kind: output, shape index: {}]
  %s11 = sld [smem:[#allocation0]]
  $region58: #{tpu_custom_call.1} parent=0
    _
  %s13 = ssub.s32 1, %s11
  %s14 = scalar_select 0, %s13, %s11
  %v15 = vstv %s8
  %16 = vst [vmem:[#allocation2] sm:$0x1] %v15
  $region1: #{tpu_custom_call.1} parent=0
    #allocation3 [shape = 'u8[442368]{0}', space=vmem, size = 0x6c000, scoped, tag = 'input window, operand 3, single buffered']
    #allocation4 [shape = 's32[1]{0}', space=sflag, size = 0x4, scoped, tag = 'scoped memory for tpu_custom_call.1']
    #allocation5 [shape = 's32[1]{0}', space=sflag, size = 0x4, scoped, tag = 'scoped memory for tpu_custom_call.1']
    #allocation6 [shape = 's32[1]{0}', space=sflag, size = 0x4, scoped, tag = 'scoped memory for tpu_custom_call.1']
    #allocation7 [shape = 'u8[512]{0}', space=smem, size = 0x200, scoped, tag = 'input window, operand 9, single buffered']
    #allocation8 [shape = 'u8[512]{0}', space=vmem, size = 0x400, scoped, tag = 'output window, operand 0, single buffered']
    %17 = vsyncpa [#allocation4], 0
    %18 = vsyncpa [#allocation6], 0
    %19 = vsyncpa [#allocation5], 0
    // Predicated region
    $region2: #{tpu_custom_call.1} parent=1 // pred_check
      _
    $region3: #{tpu_custom_call.1} parent=1 // pred_check_branch
      %21 = sbr.rel (0) target = $region5
    $region4: #{tpu_custom_call.1} parent=1 // pred_region
      _
    $region5: #{tpu_custom_call.1} parent=1 // pred_fallthru
      _
    // Predicated region
    $region6: #{tpu_custom_call.1} parent=1 // pred_check
      _
    $region7: #{tpu_custom_call.1} parent=1 // pred_check_branch
      %23 = sbr.rel (0) target = $region9
    $region8: #{tpu_custom_call.1} parent=1 // pred_region
      _
    $region9: #{tpu_custom_call.1} parent=1 // pred_fallthru
      _
    // Predicated region
    $region10: #{tpu_custom_call.1} parent=1 // pred_check
      _
    $region11: #{tpu_custom_call.1} parent=1 // pred_check_branch
      %25 = sbr.rel (0) target = $region13
    $region12: #{tpu_custom_call.1} parent=1 // pred_region
      _
    $region13: #{tpu_custom_call.1} parent=1 // pred_fallthru
      _
    // Predicated region
    $region14: #{tpu_custom_call.1} parent=1 // pred_check
      _
    $region15: #{tpu_custom_call.1} parent=1 // pred_check_branch
      %27 = sbr.rel (0) target = $region17
    $region16: #{tpu_custom_call.1} parent=1 // pred_region
      %29 = vsyncadd [#allocation4], 0
      %s30 = sshll.u32 %s3, 4
      %s31 = int_to_ptr.hbm [resolvable:$true] %s30
      %s32 = sshll.u32 [#allocation3], 4
      %s33 = int_to_ptr.vmem [resolvable:$true] %s32
      %38 = dma.hbm_to_vmem [thread:$0]  %s31, 13824, %s33, [#allocation4], 192, 192, 12
    $region17: #{tpu_custom_call.1} parent=1 // pred_fallthru
      _
    // Predicated region
    $region18: #{tpu_custom_call.1} parent=1 // pred_check
      _
    $region19: #{tpu_custom_call.1} parent=1 // pred_check_branch
      %40 = sbr.rel (0) target = $region21
    $region20: #{tpu_custom_call.1} parent=1 // pred_region
      _
    $region21: #{tpu_custom_call.1} parent=1 // pred_fallthru
      _
    // Predicated region
    $region22: #{tpu_custom_call.1} parent=1 // pred_check
      _
    $region23: #{tpu_custom_call.1} parent=1 // pred_check_branch
      %42 = sbr.rel (0) target = $region25
    $region24: #{tpu_custom_call.1} parent=1 // pred_region
      _
    $region25: #{tpu_custom_call.1} parent=1 // pred_fallthru
      _
    // Predicated region
    $region26: #{tpu_custom_call.1} parent=1 // pred_check
      _
    $region27: #{tpu_custom_call.1} parent=1 // pred_check_branch
      %44 = sbr.rel (0) target = $region29
    $region28: #{tpu_custom_call.1} parent=1 // pred_region
      _
    $region29: #{tpu_custom_call.1} parent=1 // pred_fallthru
      _
    // Predicated region
    $region30: #{tpu_custom_call.1} parent=1 // pred_check
      _
    $region31: #{tpu_custom_call.1} parent=1 // pred_check_branch
      %46 = sbr.rel (0) target = $region33
    $region32: #{tpu_custom_call.1} parent=1 // pred_region
      _
    $region33: #{tpu_custom_call.1} parent=1 // pred_fallthru
      _
    // Predicated region
    $region34: #{tpu_custom_call.1} parent=1 // pred_check
      _
    $region35: #{tpu_custom_call.1} parent=1 // pred_check_branch
      %48 = sbr.rel (0) target = $region37
    $region36: #{tpu_custom_call.1} parent=1 // pred_region
      _
    $region37: #{tpu_custom_call.1} parent=1 // pred_fallthru
      _
    // Predicated region
    $region38: #{tpu_custom_call.1} parent=1 // pred_check
      _
    $region39: #{tpu_custom_call.1} parent=1 // pred_check_branch
      %50 = sbr.rel (0) target = $region41
    $region40: #{tpu_custom_call.1} parent=1 // pred_region
      %52 = vsyncadd [#allocation6], 0
      %s54 = sshll.u32 %s9, 4
      %s55 = int_to_ptr.vmem [resolvable:$true] %s54
      %57 = dma.vmem_to_smem %s55, 16, [#allocation7], [#allocation6]
    $region41: #{tpu_custom_call.1} parent=1 // pred_fallthru
      _
    // Predicated region
    $region42: #{tpu_custom_call.1} parent=1 // pred_check
      _
    $region43: #{tpu_custom_call.1} parent=1 // pred_check_branch
      %59 = sbr.rel (0) target = $region45
    $region44: #{tpu_custom_call.1} parent=1 // pred_region
      %61 = dma.done [#allocation4], 13824
    $region45: #{tpu_custom_call.1} parent=1 // pred_fallthru
      _
    // Predicated region
    $region46: #{tpu_custom_call.1} parent=1 // pred_check
      _
    $region47: #{tpu_custom_call.1} parent=1 // pred_check_branch
      %63 = sbr.rel (0) target = $region49
    $region48: #{tpu_custom_call.1} parent=1 // pred_region
      %65 = dma.done [#allocation6], 16
    $region49: #{tpu_custom_call.1} parent=1 // pred_fallthru
      _
    %66 = sfence
    %s68 = sld [smem:[#allocation7]]
    %s69 = sld [smem:[#allocation7 + $0x1]]
    %s70 = sld [smem:[#allocation7 + $0x2]]
    %v71 = vld [vmem:[%s0] sm:$0xff]
    %v72 = vld [vmem:[%s0 + $0x8] sm:$0xff]
    %v73 = vld [vmem:[%s0 + $0x10] sm:$0xff]
    %v74 = vld [vmem:[%s0 + $0x18] sm:$0xff]
    %v75 = vld [vmem:[%s0 + $0x20] sm:$0xff]
    %v76 = vld [vmem:[%s0 + $0x28] sm:$0xff]
    %v77 = vld [vmem:[%s0 + $0x30] sm:$0xff]
    %v78 = vld [vmem:[%s0 + $0x38] sm:$0xff]
    %v79 = vld [vmem:[%s0 + $0x40] sm:$0xff]
    %v80 = vld [vmem:[%s0 + $0x48] sm:$0xff]
    %v81 = vld [vmem:[%s0 + $0x50] sm:$0xff]
    %v82 = vld [vmem:[%s0 + $0x58] sm:$0xff]
    %v83 = vld [vmem:[%s0 + $0x60] sm:$0xff]
    %v84 = vld [vmem:[%s0 + $0x68] sm:$0xff]
    %v85 = vld [vmem:[%s0 + $0x70] sm:$0xff]
    %v86 = vld [vmem:[%s0 + $0x78] sm:$0xff]
    %v87 = vld [vmem:[%s1] sm:$0xff]
    %v88 = vld [vmem:[%s1 + $0x8] sm:$0xff]
    %v89 = vld [vmem:[%s1 + $0x10] sm:$0xff]
    %v90 = vld [vmem:[%s1 + $0x18] sm:$0xff]
    %v91 = vld [vmem:[%s1 + $0x20] sm:$0xff]
    %v92 = vld [vmem:[%s1 + $0x28] sm:$0xff]
    %v93 = vld [vmem:[%s1 + $0x30] sm:$0xff]
    %v94 = vld [vmem:[%s1 + $0x38] sm:$0xff]
    %v95 = vld [vmem:[%s1 + $0x40] sm:$0xff]
    %v96 = vld [vmem:[%s1 + $0x48] sm:$0xff]
    %v97 = vld [vmem:[%s1 + $0x50] sm:$0xff]
    %v98 = vld [vmem:[%s1 + $0x58] sm:$0xff]
    %v99 = vld [vmem:[%s1 + $0x60] sm:$0xff]
    %v100 = vld [vmem:[%s1 + $0x68] sm:$0xff]
    %v101 = vld [vmem:[%s1 + $0x70] sm:$0xff]
    %v102 = vld [vmem:[%s1 + $0x78] sm:$0xff]
    %v103 = vld [vmem:[%s1 + $0x80] sm:$0xff]
    %v104 = vld [vmem:[%s1 + $0x88] sm:$0xff]
    %v105 = vld [vmem:[%s1 + $0x90] sm:$0xff]
    %v106 = vld [vmem:[%s1 + $0x98] sm:$0xff]
    %v107 = vld [vmem:[%s1 + $0xa0] sm:$0xff]
    %v108 = vld [vmem:[%s1 + $0xa8] sm:$0xff]
    %v109 = vld [vmem:[%s1 + $0xb0] sm:$0xff]
    %v110 = vld [vmem:[%s1 + $0xb8] sm:$0xff]
    %v111 = vld [vmem:[%s1 + $0xc0] sm:$0xff]
    %v112 = vld [vmem:[%s1 + $0xc8] sm:$0xff]
    %v113 = vld [vmem:[%s1 + $0xd0] sm:$0xff]
    %v114 = vld [vmem:[%s1 + $0xd8] sm:$0xff]
    %v115 = vld [vmem:[%s1 + $0xe0] sm:$0xff]
    %v116 = vld [vmem:[%s1 + $0xe8] sm:$0xff]
    %v117 = vld [vmem:[%s1 + $0xf0] sm:$0x1]
    %v118 = vld [vmem:[%s1 + $0xf8] sm:$0x1]
    %v119 = vld [vmem:[%s1 + $0x100] sm:$0x1]
    %v120 = vld [vmem:[%s1 + $0x108] sm:$0x1]
    %v121 = vld [vmem:[%s1 + $0x110] sm:$0x1]
    %v122 = vld [vmem:[%s2] sm:$0x1f]
    %v124 = vperm.slane %v122, 0
    %v125 = vperm.slane %v122, 1
    %v126 = vperm.slane %v122, 2
    %v127 = vperm.slane %v122, 3
    %v128 = vperm.slane %v122, 4
    %vm134 = vcmask 400384
    %v136 = vsel %vm134, %v71, 0
    %v139 = vsel %vm134, %v72, 0
    %v142 = vsel %vm134, %v73, 0
    %v145 = vsel %vm134, %v74, 0
    %v148 = vsel %vm134, %v75, 0
    %v151 = vsel %vm134, %v76, 0
    %v154 = vsel %vm134, %v77, 0
    %v157 = vsel %vm134, %v78, 0
    %v160 = vsel %vm134, %v79, 0
    %v163 = vsel %vm134, %v80, 0
    %v166 = vsel %vm134, %v81, 0
    %v169 = vsel %vm134, %v82, 0
    %v172 = vsel %vm134, %v83, 0
    %v175 = vsel %vm134, %v84, 0
    %v178 = vsel %vm134, %v85, 0
    %v181 = vsel %vm134, %v86, 0
    %vm183 = vcmask 1040384
    %v185 = vsel %vm183, %v117, 0
    %v188 = vsel %vm183, %v118, 0
    %v191 = vsel %vm183, %v119, 0
    %v194 = vsel %vm183, %v120, 0
    %v197 = vsel %vm183, %v121, 0
    %199 = vmatpush.msra.mxu0 0.0
    %200 = vmatpush.msra.mxu0 0.0
    %201 = vmatpush.msra.mxu0 0.0
    %202 = vmatpush.msra.mxu0 0.0
    %203 = vmatpush.msra.mxu0 0.0
    %204 = vmatpush.msra.mxu0 0.0
    %205 = vmatpush.msra.mxu0 0.0
    %206 = vmatpush.msra.mxu0 0.0
    %207 = vmatpush.msra.mxu0 0.0
    %208 = vmatpush.msra.mxu0 %v185
    %209 = vmatpush.msra.mxu0 %v112
    %210 = vmatpush.msra.mxu0 %v107
    %211 = vmatpush.msra.mxu0 %v102
    %212 = vmatpush.msra.mxu0 %v97
    %213 = vmatpush.msra.mxu0 %v92
    %214 = vmatpush.msra.mxu0 %v87
    %215 = vmatmul.f32.gmra.mxu0 %v136
    %v216 = vpop.f32.mrf.mxu0
    %v217 = vadd.f32 %v124, %v216
    %218 = vmatmul.f32.gmra.mxu0 %v139
    %v219 = vpop.f32.mrf.mxu0
    %v220 = vadd.f32 %v124, %v219
    %221 = vmatmul.f32.gmra.mxu0 %v142
    %v222 = vpop.f32.mrf.mxu0
    %v223 = vadd.f32 %v124, %v222
    %224 = vmatmul.f32.gmra.mxu0 %v145
    %v225 = vpop.f32.mrf.mxu0
    %v226 = vadd.f32 %v124, %v225
    %227 = vmatmul.f32.gmra.mxu0 %v148
    %v228 = vpop.f32.mrf.mxu0
    %v229 = vadd.f32 %v124, %v228
    %230 = vmatmul.f32.gmra.mxu0 %v151
    %v231 = vpop.f32.mrf.mxu0
    %v232 = vadd.f32 %v124, %v231
    %233 = vmatmul.f32.gmra.mxu0 %v154
    %v234 = vpop.f32.mrf.mxu0
    %v235 = vadd.f32 %v124, %v234
    %236 = vmatmul.f32.gmra.mxu0 %v157
    %v237 = vpop.f32.mrf.mxu0
    %v238 = vadd.f32 %v124, %v237
    %239 = vmatmul.f32.gmra.mxu0 %v160
    %v240 = vpop.f32.mrf.mxu0
    %v241 = vadd.f32 %v124, %v240
    %242 = vmatmul.f32.gmra.mxu0 %v163
    %v243 = vpop.f32.mrf.mxu0
    %v244 = vadd.f32 %v124, %v243
    %245 = vmatmul.f32.gmra.mxu0 %v166
    %v246 = vpop.f32.mrf.mxu0
    %v247 = vadd.f32 %v124, %v246
    %248 = vmatmul.f32.gmra.mxu0 %v169
    %v249 = vpop.f32.mrf.mxu0
    %v250 = vadd.f32 %v124, %v249
    %251 = vmatmul.f32.gmra.mxu0 %v172
    %v252 = vpop.f32.mrf.mxu0
    %v253 = vadd.f32 %v124, %v252
    %254 = vmatmul.f32.gmra.mxu0 %v175
    %v255 = vpop.f32.mrf.mxu0
    %v256 = vadd.f32 %v124, %v255
    %257 = vmatmul.f32.gmra.mxu0 %v178
    %v258 = vpop.f32.mrf.mxu0
    %v259 = vadd.f32 %v124, %v258
    %260 = vmatmul.f32.gmra.mxu0 %v181
    %v261 = vpop.f32.mrf.mxu0
    %v262 = vadd.f32 %v124, %v261
    %263 = vdwg.mxu0
    %264 = vmatpush.msra.mxu0 0.0
    %265 = vmatpush.msra.mxu0 0.0
    %266 = vmatpush.msra.mxu0 0.0
    %267 = vmatpush.msra.mxu0 0.0
    %268 = vmatpush.msra.mxu0 0.0
    %269 = vmatpush.msra.mxu0 0.0
    %270 = vmatpush.msra.mxu0 0.0
    %271 = vmatpush.msra.mxu0 0.0
    %272 = vmatpush.msra.mxu0 0.0
    %273 = vmatpush.msra.mxu0 %v188
    %274 = vmatpush.msra.mxu0 %v113
    %275 = vmatpush.msra.mxu0 %v108
    %276 = vmatpush.msra.mxu0 %v103
    %277 = vmatpush.msra.mxu0 %v98
    %278 = vmatpush.msra.mxu0 %v93
    %279 = vmatpush.msra.mxu0 %v88
    %280 = vmatmul.f32.gmra.mxu0 %v136
    %v281 = vpop.f32.mrf.mxu0
    %v282 = vadd.f32 %v125, %v281
    %283 = vmatmul.f32.gmra.mxu0 %v139
    %v284 = vpop.f32.mrf.mxu0
    %v285 = vadd.f32 %v125, %v284
    %286 = vmatmul.f32.gmra.mxu0 %v142
    %v287 = vpop.f32.mrf.mxu0
    %v288 = vadd.f32 %v125, %v287
    %289 = vmatmul.f32.gmra.mxu0 %v145
    %v290 = vpop.f32.mrf.mxu0
    %v291 = vadd.f32 %v125, %v290
    %292 = vmatmul.f32.gmra.mxu0 %v148
    %v293 = vpop.f32.mrf.mxu0
    %v294 = vadd.f32 %v125, %v293
    %295 = vmatmul.f32.gmra.mxu0 %v151
    %v296 = vpop.f32.mrf.mxu0
    %v297 = vadd.f32 %v125, %v296
    %298 = vmatmul.f32.gmra.mxu0 %v154
    %v299 = vpop.f32.mrf.mxu0
    %v300 = vadd.f32 %v125, %v299
    %301 = vmatmul.f32.gmra.mxu0 %v157
    %v302 = vpop.f32.mrf.mxu0
    %v303 = vadd.f32 %v125, %v302
    %304 = vmatmul.f32.gmra.mxu0 %v160
    %v305 = vpop.f32.mrf.mxu0
    %v306 = vadd.f32 %v125, %v305
    %307 = vmatmul.f32.gmra.mxu0 %v163
    %v308 = vpop.f32.mrf.mxu0
    %v309 = vadd.f32 %v125, %v308
    %310 = vmatmul.f32.gmra.mxu0 %v166
    %v311 = vpop.f32.mrf.mxu0
    %v312 = vadd.f32 %v125, %v311
    %313 = vmatmul.f32.gmra.mxu0 %v169
    %v314 = vpop.f32.mrf.mxu0
    %v315 = vadd.f32 %v125, %v314
    %316 = vmatmul.f32.gmra.mxu0 %v172
    %v317 = vpop.f32.mrf.mxu0
    %v318 = vadd.f32 %v125, %v317
    %319 = vmatmul.f32.gmra.mxu0 %v175
    %v320 = vpop.f32.mrf.mxu0
    %v321 = vadd.f32 %v125, %v320
    %322 = vmatmul.f32.gmra.mxu0 %v178
    %v323 = vpop.f32.mrf.mxu0
    %v324 = vadd.f32 %v125, %v323
    %325 = vmatmul.f32.gmra.mxu0 %v181
    %v326 = vpop.f32.mrf.mxu0
    %v327 = vadd.f32 %v125, %v326
    %328 = vdwg.mxu0
    %329 = vmatpush.msra.mxu0 0.0
    %330 = vmatpush.msra.mxu0 0.0
    %331 = vmatpush.msra.mxu0 0.0
    %332 = vmatpush.msra.mxu0 0.0
    %333 = vmatpush.msra.mxu0 0.0
    %334 = vmatpush.msra.mxu0 0.0
    %335 = vmatpush.msra.mxu0 0.0
    %336 = vmatpush.msra.mxu0 0.0
    %337 = vmatpush.msra.mxu0 0.0
    %338 = vmatpush.msra.mxu0 %v191
    %339 = vmatpush.msra.mxu0 %v114
    %340 = vmatpush.msra.mxu0 %v109
    %341 = vmatpush.msra.mxu0 %v104
    %342 = vmatpush.msra.mxu0 %v99
    %343 = vmatpush.msra.mxu0 %v94
    %344 = vmatpush.msra.mxu0 %v89
    %345 = vmatmul.f32.gmra.mxu0 %v136
    %v346 = vpop.f32.mrf.mxu0
    %v347 = vadd.f32 %v126, %v346
    %348 = vmatmul.f32.gmra.mxu0 %v139
    %v349 = vpop.f32.mrf.mxu0
    %v350 = vadd.f32 %v126, %v349
    %351 = vmatmul.f32.gmra.mxu0 %v142
    %v352 = vpop.f32.mrf.mxu0
    %v353 = vadd.f32 %v126, %v352
    %354 = vmatmul.f32.gmra.mxu0 %v145
    %v355 = vpop.f32.mrf.mxu0
    %v356 = vadd.f32 %v126, %v355
    %357 = vmatmul.f32.gmra.mxu0 %v148
    %v358 = vpop.f32.mrf.mxu0
    %v359 = vadd.f32 %v126, %v358
    %360 = vmatmul.f32.gmra.mxu0 %v151
    %v361 = vpop.f32.mrf.mxu0
    %v362 = vadd.f32 %v126, %v361
    %363 = vmatmul.f32.gmra.mxu0 %v154
    %v364 = vpop.f32.mrf.mxu0
    %v365 = vadd.f32 %v126, %v364
    %366 = vmatmul.f32.gmra.mxu0 %v157
    %v367 = vpop.f32.mrf.mxu0
    %v368 = vadd.f32 %v126, %v367
    %369 = vmatmul.f32.gmra.mxu0 %v160
    %v370 = vpop.f32.mrf.mxu0
    %v371 = vadd.f32 %v126, %v370
    %372 = vmatmul.f32.gmra.mxu0 %v163
    %v373 = vpop.f32.mrf.mxu0
    %v374 = vadd.f32 %v126, %v373
    %375 = vmatmul.f32.gmra.mxu0 %v166
    %v376 = vpop.f32.mrf.mxu0
    %v377 = vadd.f32 %v126, %v376
    %378 = vmatmul.f32.gmra.mxu0 %v169
    %v379 = vpop.f32.mrf.mxu0
    %v380 = vadd.f32 %v126, %v379
    %381 = vmatmul.f32.gmra.mxu0 %v172
    %v382 = vpop.f32.mrf.mxu0
    %v383 = vadd.f32 %v126, %v382
    %384 = vmatmul.f32.gmra.mxu0 %v175
    %v385 = vpop.f32.mrf.mxu0
    %v386 = vadd.f32 %v126, %v385
    %387 = vmatmul.f32.gmra.mxu0 %v178
    %v388 = vpop.f32.mrf.mxu0
    %v389 = vadd.f32 %v126, %v388
    %390 = vmatmul.f32.gmra.mxu0 %v181
    %v391 = vpop.f32.mrf.mxu0
    %v392 = vadd.f32 %v126, %v391
    %393 = vdwg.mxu0
    %394 = vmatpush.msra.mxu0 0.0
    %395 = vmatpush.msra.mxu0 0.0
    %396 = vmatpush.msra.mxu0 0.0
    %397 = vmatpush.msra.mxu0 0.0
    %398 = vmatpush.msra.mxu0 0.0
    %399 = vmatpush.msra.mxu0 0.0
    %400 = vmatpush.msra.mxu0 0.0
    %401 = vmatpush.msra.mxu0 0.0
    %402 = vmatpush.msra.mxu0 0.0
    %403 = vmatpush.msra.mxu0 %v194
    %404 = vmatpush.msra.mxu0 %v115
    %405 = vmatpush.msra.mxu0 %v110
    %406 = vmatpush.msra.mxu0 %v105
    %407 = vmatpush.msra.mxu0 %v100
    %408 = vmatpush.msra.mxu0 %v95
    %409 = vmatpush.msra.mxu0 %v90
    %410 = vmatmul.f32.gmra.mxu0 %v136
    %v411 = vpop.f32.mrf.mxu0
    %v412 = vadd.f32 %v127, %v411
    %413 = vmatmul.f32.gmra.mxu0 %v139
    %v414 = vpop.f32.mrf.mxu0
    %v415 = vadd.f32 %v127, %v414
    %416 = vmatmul.f32.gmra.mxu0 %v142
    %v417 = vpop.f32.mrf.mxu0
    %v418 = vadd.f32 %v127, %v417
    %419 = vmatmul.f32.gmra.mxu0 %v145
    %v420 = vpop.f32.mrf.mxu0
    %v421 = vadd.f32 %v127, %v420
    %422 = vmatmul.f32.gmra.mxu0 %v148
    %v423 = vpop.f32.mrf.mxu0
    %v424 = vadd.f32 %v127, %v423
    %425 = vmatmul.f32.gmra.mxu0 %v151
    %v426 = vpop.f32.mrf.mxu0
    %v427 = vadd.f32 %v127, %v426
    %428 = vmatmul.f32.gmra.mxu0 %v154
    %v429 = vpop.f32.mrf.mxu0
    %v430 = vadd.f32 %v127, %v429
    %431 = vmatmul.f32.gmra.mxu0 %v157
    %v432 = vpop.f32.mrf.mxu0
    %v433 = vadd.f32 %v127, %v432
    %434 = vmatmul.f32.gmra.mxu0 %v160
    %v435 = vpop.f32.mrf.mxu0
    %v436 = vadd.f32 %v127, %v435
    %437 = vmatmul.f32.gmra.mxu0 %v163
    %v438 = vpop.f32.mrf.mxu0
    %v439 = vadd.f32 %v127, %v438
    %440 = vmatmul.f32.gmra.mxu0 %v166
    %v441 = vpop.f32.mrf.mxu0
    %v442 = vadd.f32 %v127, %v441
    %443 = vmatmul.f32.gmra.mxu0 %v169
    %v444 = vpop.f32.mrf.mxu0
    %v445 = vadd.f32 %v127, %v444
    %446 = vmatmul.f32.gmra.mxu0 %v172
    %v447 = vpop.f32.mrf.mxu0
    %v448 = vadd.f32 %v127, %v447
    %449 = vmatmul.f32.gmra.mxu0 %v175
    %v450 = vpop.f32.mrf.mxu0
    %v451 = vadd.f32 %v127, %v450
    %452 = vmatmul.f32.gmra.mxu0 %v178
    %v453 = vpop.f32.mrf.mxu0
    %v454 = vadd.f32 %v127, %v453
    %455 = vmatmul.f32.gmra.mxu0 %v181
    %v456 = vpop.f32.mrf.mxu0
    %v457 = vadd.f32 %v127, %v456
    %458 = vdwg.mxu0
    %459 = vmatpush.msra.mxu0 0.0
    %460 = vmatpush.msra.mxu0 0.0
    %461 = vmatpush.msra.mxu0 0.0
    %462 = vmatpush.msra.mxu0 0.0
    %463 = vmatpush.msra.mxu0 0.0
    %464 = vmatpush.msra.mxu0 0.0
    %465 = vmatpush.msra.mxu0 0.0
    %466 = vmatpush.msra.mxu0 0.0
    %467 = vmatpush.msra.mxu0 0.0
    %468 = vmatpush.msra.mxu0 %v197
    %469 = vmatpush.msra.mxu0 %v116
    %470 = vmatpush.msra.mxu0 %v111
    %471 = vmatpush.msra.mxu0 %v106
    %472 = vmatpush.msra.mxu0 %v101
    %473 = vmatpush.msra.mxu0 %v96
    %474 = vmatpush.msra.mxu0 %v91
    %475 = vmatmul.f32.gmra.mxu0 %v136
    %v476 = vpop.f32.mrf.mxu0
    %v477 = vadd.f32 %v128, %v476
    %478 = vmatmul.f32.gmra.mxu0 %v139
    %v479 = vpop.f32.mrf.mxu0
    %v480 = vadd.f32 %v128, %v479
    %481 = vmatmul.f32.gmra.mxu0 %v142
    %v482 = vpop.f32.mrf.mxu0
    %v483 = vadd.f32 %v128, %v482
    %484 = vmatmul.f32.gmra.mxu0 %v145
    %v485 = vpop.f32.mrf.mxu0
    %v486 = vadd.f32 %v128, %v485
    %487 = vmatmul.f32.gmra.mxu0 %v148
    %v488 = vpop.f32.mrf.mxu0
    %v489 = vadd.f32 %v128, %v488
    %490 = vmatmul.f32.gmra.mxu0 %v151
    %v491 = vpop.f32.mrf.mxu0
    %v492 = vadd.f32 %v128, %v491
    %493 = vmatmul.f32.gmra.mxu0 %v154
    %v494 = vpop.f32.mrf.mxu0
    %v495 = vadd.f32 %v128, %v494
    %496 = vmatmul.f32.gmra.mxu0 %v157
    %v497 = vpop.f32.mrf.mxu0
    %v498 = vadd.f32 %v128, %v497
    %499 = vmatmul.f32.gmra.mxu0 %v160
    %v500 = vpop.f32.mrf.mxu0
    %v501 = vadd.f32 %v128, %v500
    %502 = vmatmul.f32.gmra.mxu0 %v163
    %v503 = vpop.f32.mrf.mxu0
    %v504 = vadd.f32 %v128, %v503
    %505 = vmatmul.f32.gmra.mxu0 %v166
    %v506 = vpop.f32.mrf.mxu0
    %v507 = vadd.f32 %v128, %v506
    %508 = vmatmul.f32.gmra.mxu0 %v169
    %v509 = vpop.f32.mrf.mxu0
    %v510 = vadd.f32 %v128, %v509
    %511 = vmatmul.f32.gmra.mxu0 %v172
    %v512 = vpop.f32.mrf.mxu0
    %v513 = vadd.f32 %v128, %v512
    %514 = vmatmul.f32.gmra.mxu0 %v175
    %v515 = vpop.f32.mrf.mxu0
    %v516 = vadd.f32 %v128, %v515
    %517 = vmatmul.f32.gmra.mxu0 %v178
    %v518 = vpop.f32.mrf.mxu0
    %v519 = vadd.f32 %v128, %v518
    %520 = vmatmul.f32.gmra.mxu0 %v181
    %v521 = vpop.f32.mrf.mxu0
    %v522 = vadd.f32 %v128, %v521
    %523 = vdwg.mxu0
    %vm524 = vcmp.ge.f32.partialorder %v217, 0.0
    %vm525 = vcmp.ge.f32.partialorder %v282, 0.0
    %vm526 = vcmp.ge.f32.partialorder %v347, 0.0
    %vm527 = vcmp.ge.f32.partialorder %v412, 0.0
    %vm528 = vcmp.ge.f32.partialorder %v477, 0.0
    %vm529 = vcmp.ge.f32.partialorder %v220, 0.0
    %vm530 = vcmp.ge.f32.partialorder %v285, 0.0
    %vm531 = vcmp.ge.f32.partialorder %v350, 0.0
    %vm532 = vcmp.ge.f32.partialorder %v415, 0.0
    %vm533 = vcmp.ge.f32.partialorder %v480, 0.0
    %vm534 = vcmp.ge.f32.partialorder %v223, 0.0
    %vm535 = vcmp.ge.f32.partialorder %v288, 0.0
    %vm536 = vcmp.ge.f32.partialorder %v353, 0.0
    %vm537 = vcmp.ge.f32.partialorder %v418, 0.0
    %vm538 = vcmp.ge.f32.partialorder %v483, 0.0
    %vm539 = vcmp.ge.f32.partialorder %v226, 0.0
    %vm540 = vcmp.ge.f32.partialorder %v291, 0.0
    %vm541 = vcmp.ge.f32.partialorder %v356, 0.0
    %vm542 = vcmp.ge.f32.partialorder %v421, 0.0
    %vm543 = vcmp.ge.f32.partialorder %v486, 0.0
    %vm544 = vcmp.ge.f32.partialorder %v229, 0.0
    %vm545 = vcmp.ge.f32.partialorder %v294, 0.0
    %vm546 = vcmp.ge.f32.partialorder %v359, 0.0
    %vm547 = vcmp.ge.f32.partialorder %v424, 0.0
    %vm548 = vcmp.ge.f32.partialorder %v489, 0.0
    %vm549 = vcmp.ge.f32.partialorder %v232, 0.0
    %vm550 = vcmp.ge.f32.partialorder %v297, 0.0
    %vm551 = vcmp.ge.f32.partialorder %v362, 0.0
    %vm552 = vcmp.ge.f32.partialorder %v427, 0.0
    %vm553 = vcmp.ge.f32.partialorder %v492, 0.0
    %vm554 = vcmp.ge.f32.partialorder %v235, 0.0
    %vm555 = vcmp.ge.f32.partialorder %v300, 0.0
    %vm556 = vcmp.ge.f32.partialorder %v365, 0.0
    %vm557 = vcmp.ge.f32.partialorder %v430, 0.0
    %vm558 = vcmp.ge.f32.partialorder %v495, 0.0
    %vm559 = vcmp.ge.f32.partialorder %v238, 0.0
    %vm560 = vcmp.ge.f32.partialorder %v303, 0.0
    %vm561 = vcmp.ge.f32.partialorder %v368, 0.0
    %vm562 = vcmp.ge.f32.partialorder %v433, 0.0
    %vm563 = vcmp.ge.f32.partialorder %v498, 0.0
    %vm564 = vcmp.ge.f32.partialorder %v241, 0.0
    %vm565 = vcmp.ge.f32.partialorder %v306, 0.0
    %vm566 = vcmp.ge.f32.partialorder %v371, 0.0
    %vm567 = vcmp.ge.f32.partialorder %v436, 0.0
    %vm568 = vcmp.ge.f32.partialorder %v501, 0.0
    %vm569 = vcmp.ge.f32.partialorder %v244, 0.0
    %vm570 = vcmp.ge.f32.partialorder %v309, 0.0
    %vm571 = vcmp.ge.f32.partialorder %v374, 0.0
    %vm572 = vcmp.ge.f32.partialorder %v439, 0.0
    %vm573 = vcmp.ge.f32.partialorder %v504, 0.0
    %vm574 = vcmp.ge.f32.partialorder %v247, 0.0
    %vm575 = vcmp.ge.f32.partialorder %v312, 0.0
    %vm576 = vcmp.ge.f32.partialorder %v377, 0.0
    %vm577 = vcmp.ge.f32.partialorder %v442, 0.0
    %vm578 = vcmp.ge.f32.partialorder %v507, 0.0
    %vm579 = vcmp.ge.f32.partialorder %v250, 0.0
    %vm580 = vcmp.ge.f32.partialorder %v315, 0.0
    %vm581 = vcmp.ge.f32.partialorder %v380, 0.0
    %vm582 = vcmp.ge.f32.partialorder %v445, 0.0
    %vm583 = vcmp.ge.f32.partialorder %v510, 0.0
    %vm584 = vcmp.ge.f32.partialorder %v253, 0.0
    %vm585 = vcmp.ge.f32.partialorder %v318, 0.0
    %vm586 = vcmp.ge.f32.partialorder %v383, 0.0
    %vm587 = vcmp.ge.f32.partialorder %v448, 0.0
    %vm588 = vcmp.ge.f32.partialorder %v513, 0.0
    %vm589 = vcmp.ge.f32.partialorder %v256, 0.0
    %vm590 = vcmp.ge.f32.partialorder %v321, 0.0
    %vm591 = vcmp.ge.f32.partialorder %v386, 0.0
    %vm592 = vcmp.ge.f32.partialorder %v451, 0.0
    %vm593 = vcmp.ge.f32.partialorder %v516, 0.0
    %vm594 = vcmp.ge.f32.partialorder %v259, 0.0
    %vm595 = vcmp.ge.f32.partialorder %v324, 0.0
    %vm596 = vcmp.ge.f32.partialorder %v389, 0.0
    %vm597 = vcmp.ge.f32.partialorder %v454, 0.0
    %vm598 = vcmp.ge.f32.partialorder %v519, 0.0
    %vm599 = vcmp.ge.f32.partialorder %v262, 0.0
    %vm600 = vcmp.ge.f32.partialorder %v327, 0.0
    %vm601 = vcmp.ge.f32.partialorder %v392, 0.0
    %vm602 = vcmp.ge.f32.partialorder %v457, 0.0
    %vm603 = vcmp.ge.f32.partialorder %v522, 0.0
    %v604 = vstv %s68
    %v605 = vmul.f32 %v604, %v217
    %v606 = vmul.f32 %v604, %v282
    %v607 = vmul.f32 %v604, %v347
    %v608 = vmul.f32 %v604, %v412
    %v609 = vmul.f32 %v604, %v477
    %v610 = vmul.f32 %v604, %v220
    %v611 = vmul.f32 %v604, %v285
    %v612 = vmul.f32 %v604, %v350
    %v613 = vmul.f32 %v604, %v415
    %v614 = vmul.f32 %v604, %v480
    %v615 = vmul.f32 %v604, %v223
    %v616 = vmul.f32 %v604, %v288
    %v617 = vmul.f32 %v604, %v353
    %v618 = vmul.f32 %v604, %v418
    %v619 = vmul.f32 %v604, %v483
    %v620 = vmul.f32 %v604, %v226
    %v621 = vmul.f32 %v604, %v291
    %v622 = vmul.f32 %v604, %v356
    %v623 = vmul.f32 %v604, %v421
    %v624 = vmul.f32 %v604, %v486
    %v625 = vmul.f32 %v604, %v229
    %v626 = vmul.f32 %v604, %v294
    %v627 = vmul.f32 %v604, %v359
    %v628 = vmul.f32 %v604, %v424
    %v629 = vmul.f32 %v604, %v489
    %v630 = vmul.f32 %v604, %v232
    %v631 = vmul.f32 %v604, %v297
    %v632 = vmul.f32 %v604, %v362
    %v633 = vmul.f32 %v604, %v427
    %v634 = vmul.f32 %v604, %v492
    %v635 = vmul.f32 %v604, %v235
    %v636 = vmul.f32 %v604, %v300
    %v637 = vmul.f32 %v604, %v365
    %v638 = vmul.f32 %v604, %v430
    %v639 = vmul.f32 %v604, %v495
    %v640 = vmul.f32 %v604, %v238
    %v641 = vmul.f32 %v604, %v303
    %v642 = vmul.f32 %v604, %v368
    %v643 = vmul.f32 %v604, %v433
    %v644 = vmul.f32 %v604, %v498
    %v645 = vmul.f32 %v604, %v241
    %v646 = vmul.f32 %v604, %v306
    %v647 = vmul.f32 %v604, %v371
    %v648 = vmul.f32 %v604, %v436
    %v649 = vmul.f32 %v604, %v501
    %v650 = vmul.f32 %v604, %v244
    %v651 = vmul.f32 %v604, %v309
    %v652 = vmul.f32 %v604, %v374
    %v653 = vmul.f32 %v604, %v439
    %v654 = vmul.f32 %v604, %v504
    %v655 = vmul.f32 %v604, %v247
    %v656 = vmul.f32 %v604, %v312
    %v657 = vmul.f32 %v604, %v377
    %v658 = vmul.f32 %v604, %v442
    %v659 = vmul.f32 %v604, %v507
    %v660 = vmul.f32 %v604, %v250
    %v661 = vmul.f32 %v604, %v315
    %v662 = vmul.f32 %v604, %v380
    %v663 = vmul.f32 %v604, %v445
    %v664 = vmul.f32 %v604, %v510
    %v665 = vmul.f32 %v604, %v253
    %v666 = vmul.f32 %v604, %v318
    %v667 = vmul.f32 %v604, %v383
    %v668 = vmul.f32 %v604, %v448
    %v669 = vmul.f32 %v604, %v513
    %v670 = vmul.f32 %v604, %v256
    %v671 = vmul.f32 %v604, %v321
    %v672 = vmul.f32 %v604, %v386
    %v673 = vmul.f32 %v604, %v451
    %v674 = vmul.f32 %v604, %v516
    %v675 = vmul.f32 %v604, %v259
    %v676 = vmul.f32 %v604, %v324
    %v677 = vmul.f32 %v604, %v389
    %v678 = vmul.f32 %v604, %v454
    %v679 = vmul.f32 %v604, %v519
    %v680 = vmul.f32 %v604, %v262
    %v681 = vmul.f32 %v604, %v327
    %v682 = vmul.f32 %v604, %v392
    %v683 = vmul.f32 %v604, %v457
    %v684 = vmul.f32 %v604, %v522
    %v685 = vsel %vm524, %v217, %v605
    %v686 = vsel %vm525, %v282, %v606
    %v687 = vsel %vm526, %v347, %v607
    %v688 = vsel %vm527, %v412, %v608
    %v689 = vsel %vm528, %v477, %v609
    %v690 = vsel %vm529, %v220, %v610
    %v691 = vsel %vm530, %v285, %v611
    %v692 = vsel %vm531, %v350, %v612
    %v693 = vsel %vm532, %v415, %v613
    %v694 = vsel %vm533, %v480, %v614
    %v695 = vsel %vm534, %v223, %v615
    %v696 = vsel %vm535, %v288, %v616
    %v697 = vsel %vm536, %v353, %v617
    %v698 = vsel %vm537, %v418, %v618
    %v699 = vsel %vm538, %v483, %v619
    %v700 = vsel %vm539, %v226, %v620
    %v701 = vsel %vm540, %v291, %v621
    %v702 = vsel %vm541, %v356, %v622
    %v703 = vsel %vm542, %v421, %v623
    %v704 = vsel %vm543, %v486, %v624
    %v705 = vsel %vm544, %v229, %v625
    %v706 = vsel %vm545, %v294, %v626
    %v707 = vsel %vm546, %v359, %v627
    %v708 = vsel %vm547, %v424, %v628
    %v709 = vsel %vm548, %v489, %v629
    %v710 = vsel %vm549, %v232, %v630
    %v711 = vsel %vm550, %v297, %v631
    %v712 = vsel %vm551, %v362, %v632
    %v713 = vsel %vm552, %v427, %v633
    %v714 = vsel %vm553, %v492, %v634
    %v715 = vsel %vm554, %v235, %v635
    %v716 = vsel %vm555, %v300, %v636
    %v717 = vsel %vm556, %v365, %v637
    %v718 = vsel %vm557, %v430, %v638
    %v719 = vsel %vm558, %v495, %v639
    %v720 = vsel %vm559, %v238, %v640
    %v721 = vsel %vm560, %v303, %v641
    %v722 = vsel %vm561, %v368, %v642
    %v723 = vsel %vm562, %v433, %v643
    %v724 = vsel %vm563, %v498, %v644
    %v725 = vsel %vm564, %v241, %v645
    %v726 = vsel %vm565, %v306, %v646
    %v727 = vsel %vm566, %v371, %v647
    %v728 = vsel %vm567, %v436, %v648
    %v729 = vsel %vm568, %v501, %v649
    %v730 = vsel %vm569, %v244, %v650
    %v731 = vsel %vm570, %v309, %v651
    %v732 = vsel %vm571, %v374, %v652
    %v733 = vsel %vm572, %v439, %v653
    %v734 = vsel %vm573, %v504, %v654
    %v735 = vsel %vm574, %v247, %v655
    %v736 = vsel %vm575, %v312, %v656
    %v737 = vsel %vm576, %v377, %v657
    %v738 = vsel %vm577, %v442, %v658
    %v739 = vsel %vm578, %v507, %v659
    %v740 = vsel %vm579, %v250, %v660
    %v741 = vsel %vm580, %v315, %v661
    %v742 = vsel %vm581, %v380, %v662
    %v743 = vsel %vm582, %v445, %v663
    %v744 = vsel %vm583, %v510, %v664
    %v745 = vsel %vm584, %v253, %v665
    %v746 = vsel %vm585, %v318, %v666
    %v747 = vsel %vm586, %v383, %v667
    %v748 = vsel %vm587, %v448, %v668
    %v749 = vsel %vm588, %v513, %v669
    %v750 = vsel %vm589, %v256, %v670
    %v751 = vsel %vm590, %v321, %v671
    %v752 = vsel %vm591, %v386, %v672
    %v753 = vsel %vm592, %v451, %v673
    %v754 = vsel %vm593, %v516, %v674
    %v755 = vsel %vm594, %v259, %v675
    %v756 = vsel %vm595, %v324, %v676
    %v757 = vsel %vm596, %v389, %v677
    %v758 = vsel %vm597, %v454, %v678
    %v759 = vsel %vm598, %v519, %v679
    %v760 = vsel %vm599, %v262, %v680
    %v761 = vsel %vm600, %v327, %v681
    %v762 = vsel %vm601, %v392, %v682
    %v763 = vsel %vm602, %v457, %v683
    %v764 = vsel %vm603, %v522, %v684
    %v765 = vpack.c.bf16 %v690, %v685
    %v766 = vpack.c.bf16 %v691, %v686
    %v767 = vpack.c.bf16 %v692, %v687
    %v768 = vpack.c.bf16 %v693, %v688
    %v769 = vpack.c.bf16 %v694, %v689
    %v770 = vpack.c.bf16 %v700, %v695
    %v771 = vpack.c.bf16 %v701, %v696
    %v772 = vpack.c.bf16 %v702, %v697
    %v773 = vpack.c.bf16 %v703, %v698
    %v774 = vpack.c.bf16 %v704, %v699
    %v775 = vpack.c.bf16 %v710, %v705
    %v776 = vpack.c.bf16 %v711, %v706
    %v777 = vpack.c.bf16 %v712, %v707
    %v778 = vpack.c.bf16 %v713, %v708
    %v779 = vpack.c.bf16 %v714, %v709
    %v780 = vpack.c.bf16 %v720, %v715
    %v781 = vpack.c.bf16 %v721, %v716
    %v782 = vpack.c.bf16 %v722, %v717
    %v783 = vpack.c.bf16 %v723, %v718
    %v784 = vpack.c.bf16 %v724, %v719
    %v785 = vpack.c.bf16 %v730, %v725
    %v786 = vpack.c.bf16 %v731, %v726
    %v787 = vpack.c.bf16 %v732, %v727
    %v788 = vpack.c.bf16 %v733, %v728
    %v789 = vpack.c.bf16 %v734, %v729
    %v790 = vpack.c.bf16 %v740, %v735
    %v791 = vpack.c.bf16 %v741, %v736
    %v792 = vpack.c.bf16 %v742, %v737
    %v793 = vpack.c.bf16 %v743, %v738
    %v794 = vpack.c.bf16 %v744, %v739
    %v795 = vpack.c.bf16 %v750, %v745
    %v796 = vpack.c.bf16 %v751, %v746
    %v797 = vpack.c.bf16 %v752, %v747
    %v798 = vpack.c.bf16 %v753, %v748
    %v799 = vpack.c.bf16 %v754, %v749
    %v800 = vpack.c.bf16 %v760, %v755
    %v801 = vpack.c.bf16 %v761, %v756
    %v802 = vpack.c.bf16 %v762, %v757
    %v803 = vpack.c.bf16 %v763, %v758
    %v804 = vpack.c.bf16 %v764, %v759
    %v805 = vld [vmem:[#allocation3] sm:$0xff]
    %v806 = vld [vmem:[#allocation3 + $0x8] sm:$0xf]
    %v807 = vld [vmem:[#allocation3 + $0xc] sm:$0xff]
    %v808 = vld [vmem:[#allocation3 + $0x14] sm:$0xf]
    %v809 = vld [vmem:[#allocation3 + $0x18] sm:$0xff]
    %v810 = vld [vmem:[#allocation3 + $0x20] sm:$0xf]
    %v811 = vld [vmem:[#allocation3 + $0x24] sm:$0xff]
    %v812 = vld [vmem:[#allocation3 + $0x2c] sm:$0xf]
    %v813 = vld [vmem:[#allocation3 + $0x30] sm:$0xff]
    %v814 = vld [vmem:[#allocation3 + $0x38] sm:$0xf]
    %v815 = vld [vmem:[#allocation3 + $0x3c] sm:$0xff]
    %v816 = vld [vmem:[#allocation3 + $0x44] sm:$0xf]
    %v817 = vld [vmem:[#allocation3 + $0x48] sm:$0xff]
    %v818 = vld [vmem:[#allocation3 + $0x50] sm:$0xf]
    %v819 = vld [vmem:[#allocation3 + $0x54] sm:$0xff]
    %v820 = vld [vmem:[#allocation3 + $0x5c] sm:$0xf]
    %v821 = vld [vmem:[#allocation3 + $0x60] sm:$0xff]
    %v822 = vld [vmem:[#allocation3 + $0x68] sm:$0xf]
    %v823 = vld [vmem:[#allocation3 + $0x6c] sm:$0xff]
    %v824 = vld [vmem:[#allocation3 + $0x74] sm:$0xf]
    %v825 = vld [vmem:[#allocation3 + $0x78] sm:$0xff]
    %v826 = vld [vmem:[#allocation3 + $0x80] sm:$0xf]
    %v827 = vld [vmem:[#allocation3 + $0x84] sm:$0xff]
    %v828 = vld [vmem:[#allocation3 + $0x8c] sm:$0xf]
    %v829 = vld [vmem:[#allocation3 + $0x90] sm:$0xff]
    %v830 = vld [vmem:[#allocation3 + $0x98] sm:$0xf]
    %v831 = vld [vmem:[#allocation3 + $0x9c] sm:$0xff]
    %v832 = vld [vmem:[#allocation3 + $0xa4] sm:$0xf]
    %v833 = vld [vmem:[#allocation3 + $0xa8] sm:$0xff]
    %v834 = vld [vmem:[#allocation3 + $0xb0] sm:$0xf]
    %v835 = vld [vmem:[#allocation3 + $0xb4] sm:$0xff]
    %v836 = vld [vmem:[#allocation3 + $0xbc] sm:$0xf]
    %v837 = vld [vmem:[#allocation3 + $0xc0] sm:$0xff]
    %v838 = vld [vmem:[#allocation3 + $0xc8] sm:$0xf]
    %v839 = vld [vmem:[#allocation3 + $0xcc] sm:$0xff]
    %v840 = vld [vmem:[#allocation3 + $0xd4] sm:$0xf]
    %v841 = vld [vmem:[#allocation3 + $0xd8] sm:$0xff]
    %v842 = vld [vmem:[#allocation3 + $0xe0] sm:$0xf]
    %v843 = vld [vmem:[#allocation3 + $0xe4] sm:$0xff]
    %v844 = vld [vmem:[#allocation3 + $0xec] sm:$0xf]
    %v845 = vld [vmem:[#allocation3 + $0xf0] sm:$0xff]
    %v846 = vld [vmem:[#allocation3 + $0xf8] sm:$0xf]
    %v847 = vld [vmem:[#allocation3 + $0xfc] sm:$0xff]
    %v848 = vld [vmem:[#allocation3 + $0x104] sm:$0xf]
    %v849 = vld [vmem:[#allocation3 + $0x108] sm:$0xff]
    %v850 = vld [vmem:[#allocation3 + $0x110] sm:$0xf]
    %v851 = vld [vmem:[#allocation3 + $0x114] sm:$0xff]
    %v852 = vld [vmem:[#allocation3 + $0x11c] sm:$0xf]
    %v853 = vld [vmem:[#allocation3 + $0x120] sm:$0xff]
    %v854 = vld [vmem:[#allocation3 + $0x128] sm:$0xf]
    %v855 = vld [vmem:[#allocation3 + $0x12c] sm:$0xff]
    %v856 = vld [vmem:[#allocation3 + $0x134] sm:$0xf]
    %v857 = vld [vmem:[#allocation3 + $0x138] sm:$0xff]
    %v858 = vld [vmem:[#allocation3 + $0x140] sm:$0xf]
    %v859 = vld [vmem:[#allocation3 + $0x144] sm:$0xff]
    %v860 = vld [vmem:[#allocation3 + $0x14c] sm:$0xf]
    %v861 = vld [vmem:[#allocation3 + $0x150] sm:$0xff]
    %v862 = vld [vmem:[#allocation3 + $0x158] sm:$0xf]
    %v863 = vld [vmem:[#allocation3 + $0x15c] sm:$0xff]
    %v864 = vld [vmem:[#allocation3 + $0x164] sm:$0xf]
    %v865 = vld [vmem:[#allocation3 + $0x168] sm:$0xff]
    %v866 = vld [vmem:[#allocation3 + $0x170] sm:$0xf]
    %v867 = vld [vmem:[#allocation3 + $0x174] sm:$0xff]
    %v868 = vld [vmem:[#allocation3 + $0x17c] sm:$0xf]
    %v869 = vld [vmem:[#allocation3 + $0x180] sm:$0xff]
    %v870 = vld [vmem:[#allocation3 + $0x188] sm:$0xf]
    %v871 = vld [vmem:[#allocation3 + $0x18c] sm:$0xff]
    %v872 = vld [vmem:[#allocation3 + $0x194] sm:$0xf]
    %v873 = vld [vmem:[#allocation3 + $0x198] sm:$0xff]
    %v874 = vld [vmem:[#allocation3 + $0x1a0] sm:$0xf]
    %v875 = vld [vmem:[#allocation3 + $0x1a4] sm:$0xff]
    %v876 = vld [vmem:[#allocation3 + $0x1ac] sm:$0xf]
    %v877 = vld [vmem:[#allocation3 + $0x1b0] sm:$0xff]
    %v878 = vld [vmem:[#allocation3 + $0x1b8] sm:$0xf]
    %v879 = vld [vmem:[#allocation3 + $0x1bc] sm:$0xff]
    %v880 = vld [vmem:[#allocation3 + $0x1c4] sm:$0xf]
    %v881 = vld [vmem:[#allocation3 + $0x1c8] sm:$0xff]
    %v882 = vld [vmem:[#allocation3 + $0x1d0] sm:$0xf]
    %v883 = vld [vmem:[#allocation3 + $0x1d4] sm:$0xff]
    %v884 = vld [vmem:[#allocation3 + $0x1dc] sm:$0xf]
    %v885 = vld [vmem:[#allocation3 + $0x1e0] sm:$0xff]
    %v886 = vld [vmem:[#allocation3 + $0x1e8] sm:$0xf]
    %v887 = vld [vmem:[#allocation3 + $0x1ec] sm:$0xff]
    %v888 = vld [vmem:[#allocation3 + $0x1f4] sm:$0xf]
    %v889 = vld [vmem:[#allocation3 + $0x1f8] sm:$0xff]
    %v890 = vld [vmem:[#allocation3 + $0x200] sm:$0xf]
    %v891 = vld [vmem:[#allocation3 + $0x204] sm:$0xff]
    %v892 = vld [vmem:[#allocation3 + $0x20c] sm:$0xf]
    %v893 = vld [vmem:[#allocation3 + $0x210] sm:$0xff]
    %v894 = vld [vmem:[#allocation3 + $0x218] sm:$0xf]
    %v895 = vld [vmem:[#allocation3 + $0x21c] sm:$0xff]
    %v896 = vld [vmem:[#allocation3 + $0x224] sm:$0xf]
    %v897 = vld [vmem:[#allocation3 + $0x228] sm:$0xff]
    %v898 = vld [vmem:[#allocation3 + $0x230] sm:$0xf]
    %v899 = vld [vmem:[#allocation3 + $0x234] sm:$0xff]
    %v900 = vld [vmem:[#allocation3 + $0x23c] sm:$0xf]
    %v901 = vld [vmem:[#allocation3 + $0x240] sm:$0xff]
    %v902 = vld [vmem:[#allocation3 + $0x248] sm:$0xf]
    %v903 = vld [vmem:[#allocation3 + $0x24c] sm:$0xff]
    %v904 = vld [vmem:[#allocation3 + $0x254] sm:$0xf]
    %v905 = vld [vmem:[#allocation3 + $0x258] sm:$0xff]
    %v906 = vld [vmem:[#allocation3 + $0x260] sm:$0xf]
    %v907 = vld [vmem:[#allocation3 + $0x264] sm:$0xff]
    %v908 = vld [vmem:[#allocation3 + $0x26c] sm:$0xf]
    %v909 = vld [vmem:[#allocation3 + $0x270] sm:$0xff]
    %v910 = vld [vmem:[#allocation3 + $0x278] sm:$0xf]
    %v911 = vld [vmem:[#allocation3 + $0x27c] sm:$0xff]
    %v912 = vld [vmem:[#allocation3 + $0x284] sm:$0xf]
    %v913 = vld [vmem:[#allocation3 + $0x288] sm:$0xff]
    %v914 = vld [vmem:[#allocation3 + $0x290] sm:$0xf]
    %v915 = vld [vmem:[#allocation3 + $0x294] sm:$0xff]
    %v916 = vld [vmem:[#allocation3 + $0x29c] sm:$0xf]
    %v917 = vld [vmem:[#allocation3 + $0x2a0] sm:$0xff]
    %v918 = vld [vmem:[#allocation3 + $0x2a8] sm:$0xf]
    %v919 = vld [vmem:[#allocation3 + $0x2ac] sm:$0xff]
    %v920 = vld [vmem:[#allocation3 + $0x2b4] sm:$0xf]
    %v921 = vld [vmem:[#allocation3 + $0x2b8] sm:$0xff]
    %v922 = vld [vmem:[#allocation3 + $0x2c0] sm:$0xf]
    %v923 = vld [vmem:[#allocation3 + $0x2c4] sm:$0xff]
    %v924 = vld [vmem:[#allocation3 + $0x2cc] sm:$0xf]
    %v925 = vld [vmem:[#allocation3 + $0x2d0] sm:$0xff]
    %v926 = vld [vmem:[#allocation3 + $0x2d8] sm:$0xf]
    %v927 = vld [vmem:[#allocation3 + $0x2dc] sm:$0xff]
    %v928 = vld [vmem:[#allocation3 + $0x2e4] sm:$0xf]
    %v929 = vld [vmem:[#allocation3 + $0x2e8] sm:$0xff]
    %v930 = vld [vmem:[#allocation3 + $0x2f0] sm:$0xf]
    %v931 = vld [vmem:[#allocation3 + $0x2f4] sm:$0xff]
    %v932 = vld [vmem:[#allocation3 + $0x2fc] sm:$0xf]
    %v933 = vld [vmem:[#allocation3 + $0x300] sm:$0xff]
    %v934 = vld [vmem:[#allocation3 + $0x308] sm:$0xf]
    %v935 = vld [vmem:[#allocation3 + $0x30c] sm:$0xff]
    %v936 = vld [vmem:[#allocation3 + $0x314] sm:$0xf]
    %v937 = vld [vmem:[#allocation3 + $0x318] sm:$0xff]
    %v938 = vld [vmem:[#allocation3 + $0x320] sm:$0xf]
    %v939 = vld [vmem:[#allocation3 + $0x324] sm:$0xff]
    %v940 = vld [vmem:[#allocation3 + $0x32c] sm:$0xf]
    %v941 = vld [vmem:[#allocation3 + $0x330] sm:$0xff]
    %v942 = vld [vmem:[#allocation3 + $0x338] sm:$0xf]
    %v943 = vld [vmem:[#allocation3 + $0x33c] sm:$0xff]
    %v944 = vld [vmem:[#allocation3 + $0x344] sm:$0xf]
    %v945 = vld [vmem:[#allocation3 + $0x348] sm:$0xff]
    %v946 = vld [vmem:[#allocation3 + $0x350] sm:$0xf]
    %v947 = vld [vmem:[#allocation3 + $0x354] sm:$0xff]
    %v948 = vld [vmem:[#allocation3 + $0x35c] sm:$0xf]
    %v949 = vld [vmem:[%s4] sm:$0x7]
    %v951 = vperm.slane %v949, 0
    %v952 = vperm.slane %v949, 1
    %v953 = vperm.slane %v949, 2
    %v1101 = vunpack.c.l.b16 %v805
    %v1102 = vunpack.c.h.b16 %v805
    %v1103 = vunpack.c.l.b16 %v806
    %v1104 = vunpack.c.l.b16 %v807
    %v1105 = vunpack.c.h.b16 %v807
    %v1106 = vunpack.c.l.b16 %v808
    %v1107 = vunpack.c.l.b16 %v809
    %v1108 = vunpack.c.h.b16 %v809
    %v1109 = vunpack.c.l.b16 %v810
    %v1110 = vunpack.c.l.b16 %v811
    %v1111 = vunpack.c.h.b16 %v811
    %v1112 = vunpack.c.l.b16 %v812
    %v1113 = vunpack.c.l.b16 %v813
    %v1114 = vunpack.c.h.b16 %v813
    %v1115 = vunpack.c.l.b16 %v814
    %v1116 = vunpack.c.l.b16 %v815
    %v1117 = vunpack.c.h.b16 %v815
    %v1118 = vunpack.c.l.b16 %v816
    %v1119 = vunpack.c.l.b16 %v817
    %v1120 = vunpack.c.h.b16 %v817
    %v1121 = vunpack.c.l.b16 %v818
    %v1122 = vunpack.c.l.b16 %v819
    %v1123 = vunpack.c.h.b16 %v819
    %v1124 = vunpack.c.l.b16 %v820
    %v1125 = vunpack.c.l.b16 %v821
    %v1126 = vunpack.c.h.b16 %v821
    %v1127 = vunpack.c.l.b16 %v822
    %v1128 = vunpack.c.l.b16 %v823
    %v1129 = vunpack.c.h.b16 %v823
    %v1130 = vunpack.c.l.b16 %v824
    %v1131 = vunpack.c.l.b16 %v825
    %v1132 = vunpack.c.h.b16 %v825
    %v1133 = vunpack.c.l.b16 %v826
    %v1134 = vunpack.c.l.b16 %v827
    %v1135 = vunpack.c.h.b16 %v827
    %v1136 = vunpack.c.l.b16 %v828
    %v1137 = vunpack.c.l.b16 %v829
    %v1138 = vunpack.c.h.b16 %v829
    %v1139 = vunpack.c.l.b16 %v830
    %v1140 = vunpack.c.l.b16 %v831
    %v1141 = vunpack.c.h.b16 %v831
    %v1142 = vunpack.c.l.b16 %v832
    %v1143 = vunpack.c.l.b16 %v833
    %v1144 = vunpack.c.h.b16 %v833
    %v1145 = vunpack.c.l.b16 %v834
    %v1146 = vunpack.c.l.b16 %v835
    %v1147 = vunpack.c.h.b16 %v835
    %v1148 = vunpack.c.l.b16 %v836
    %v1149 = vunpack.c.l.b16 %v837
    %v1150 = vunpack.c.h.b16 %v837
    %v1151 = vunpack.c.l.b16 %v838
    %v1152 = vunpack.c.l.b16 %v839
    %v1153 = vunpack.c.h.b16 %v839
    %v1154 = vunpack.c.l.b16 %v840
    %v1155 = vunpack.c.l.b16 %v841
    %v1156 = vunpack.c.h.b16 %v841
    %v1157 = vunpack.c.l.b16 %v842
    %v1158 = vunpack.c.l.b16 %v843
    %v1159 = vunpack.c.h.b16 %v843
    %v1160 = vunpack.c.l.b16 %v844
    %v1161 = vunpack.c.l.b16 %v845
    %v1162 = vunpack.c.h.b16 %v845
    %v1163 = vunpack.c.l.b16 %v846
    %v1164 = vunpack.c.l.b16 %v847
    %v1165 = vunpack.c.h.b16 %v847
    %v1166 = vunpack.c.l.b16 %v848
    %v1167 = vunpack.c.l.b16 %v849
    %v1168 = vunpack.c.h.b16 %v849
    %v1169 = vunpack.c.l.b16 %v850
    %v1170 = vunpack.c.l.b16 %v851
    %v1171 = vunpack.c.h.b16 %v851
    %v1172 = vunpack.c.l.b16 %v852
    %v1173 = vunpack.c.l.b16 %v853
    %v1174 = vunpack.c.h.b16 %v853
    %v1175 = vunpack.c.l.b16 %v854
    %v1176 = vunpack.c.l.b16 %v855
    %v1177 = vunpack.c.h.b16 %v855
    %v1178 = vunpack.c.l.b16 %v856
    %v1179 = vunpack.c.l.b16 %v857
    %v1180 = vunpack.c.h.b16 %v857
    %v1181 = vunpack.c.l.b16 %v858
    %v1182 = vunpack.c.l.b16 %v859
    %v1183 = vunpack.c.h.b16 %v859
    %v1184 = vunpack.c.l.b16 %v860
    %v1185 = vunpack.c.l.b16 %v861
    %v1186 = vunpack.c.h.b16 %v861
    %v1187 = vunpack.c.l.b16 %v862
    %v1188 = vunpack.c.l.b16 %v863
    %v1189 = vunpack.c.h.b16 %v863
    %v1190 = vunpack.c.l.b16 %v864
    %v1191 = vunpack.c.l.b16 %v865
    %v1192 = vunpack.c.h.b16 %v865
    %v1193 = vunpack.c.l.b16 %v866
    %v1194 = vunpack.c.l.b16 %v867
    %v1195 = vunpack.c.h.b16 %v867
    %v1196 = vunpack.c.l.b16 %v868
    %v1197 = vunpack.c.l.b16 %v869
    %v1198 = vunpack.c.h.b16 %v869
    %v1199 = vunpack.c.l.b16 %v870
    %v1200 = vunpack.c.l.b16 %v871
    %v1201 = vunpack.c.h.b16 %v871
    %v1202 = vunpack.c.l.b16 %v872
    %v1203 = vunpack.c.l.b16 %v873
    %v1204 = vunpack.c.h.b16 %v873
    %v1205 = vunpack.c.l.b16 %v874
    %v1206 = vunpack.c.l.b16 %v875
    %v1207 = vunpack.c.h.b16 %v875
    %v1208 = vunpack.c.l.b16 %v876
    %v1209 = vunpack.c.l.b16 %v877
    %v1210 = vunpack.c.h.b16 %v877
    %v1211 = vunpack.c.l.b16 %v878
    %v1212 = vunpack.c.l.b16 %v879
    %v1213 = vunpack.c.h.b16 %v879
    %v1214 = vunpack.c.l.b16 %v880
    %v1215 = vunpack.c.l.b16 %v881
    %v1216 = vunpack.c.h.b16 %v881
    %v1217 = vunpack.c.l.b16 %v882
    %v1218 = vunpack.c.l.b16 %v883
    %v1219 = vunpack.c.h.b16 %v883
    %v1220 = vunpack.c.l.b16 %v884
    %v1221 = vunpack.c.l.b16 %v885
    %v1222 = vunpack.c.h.b16 %v885
    %v1223 = vunpack.c.l.b16 %v886
    %v1224 = vunpack.c.l.b16 %v887
    %v1225 = vunpack.c.h.b16 %v887
    %v1226 = vunpack.c.l.b16 %v888
    %v1227 = vunpack.c.l.b16 %v889
    %v1228 = vunpack.c.h.b16 %v889
    %v1229 = vunpack.c.l.b16 %v890
    %v1230 = vunpack.c.l.b16 %v891
    %v1231 = vunpack.c.h.b16 %v891
    %v1232 = vunpack.c.l.b16 %v892
    %v1233 = vunpack.c.l.b16 %v893
    %v1234 = vunpack.c.h.b16 %v893
    %v1235 = vunpack.c.l.b16 %v894
    %v1236 = vunpack.c.l.b16 %v895
    %v1237 = vunpack.c.h.b16 %v895
    %v1238 = vunpack.c.l.b16 %v896
    %v1239 = vunpack.c.l.b16 %v897
    %v1240 = vunpack.c.h.b16 %v897
    %v1241 = vunpack.c.l.b16 %v898
    %v1242 = vunpack.c.l.b16 %v899
    %v1243 = vunpack.c.h.b16 %v899
    %v1244 = vunpack.c.l.b16 %v900
    %v1245 = vunpack.c.l.b16 %v901
    %v1246 = vunpack.c.h.b16 %v901
    %v1247 = vunpack.c.l.b16 %v902
    %v1248 = vunpack.c.l.b16 %v903
    %v1249 = vunpack.c.h.b16 %v903
    %v1250 = vunpack.c.l.b16 %v904
    %v1251 = vunpack.c.l.b16 %v905
    %v1252 = vunpack.c.h.b16 %v905
    %v1253 = vunpack.c.l.b16 %v906
    %v1254 = vunpack.c.l.b16 %v907
    %v1255 = vunpack.c.h.b16 %v907
    %v1256 = vunpack.c.l.b16 %v908
    %v1257 = vunpack.c.l.b16 %v909
    %v1258 = vunpack.c.h.b16 %v909
    %v1259 = vunpack.c.l.b16 %v910
    %v1260 = vunpack.c.l.b16 %v911
    %v1261 = vunpack.c.h.b16 %v911
    %v1262 = vunpack.c.l.b16 %v912
    %v1263 = vunpack.c.l.b16 %v913
    %v1264 = vunpack.c.h.b16 %v913
    %v1265 = vunpack.c.l.b16 %v914
    %v1266 = vunpack.c.l.b16 %v915
    %v1267 = vunpack.c.h.b16 %v915
    %v1268 = vunpack.c.l.b16 %v916
    %v1269 = vunpack.c.l.b16 %v917
    %v1270 = vunpack.c.h.b16 %v917
    %v1271 = vunpack.c.l.b16 %v918
    %v1272 = vunpack.c.l.b16 %v919
    %v1273 = vunpack.c.h.b16 %v919
    %v1274 = vunpack.c.l.b16 %v920
    %v1275 = vunpack.c.l.b16 %v921
    %v1276 = vunpack.c.h.b16 %v921
    %v1277 = vunpack.c.l.b16 %v922
    %v1278 = vunpack.c.l.b16 %v923
    %v1279 = vunpack.c.h.b16 %v923
    %v1280 = vunpack.c.l.b16 %v924
    %v1281 = vunpack.c.l.b16 %v925
    %v1282 = vunpack.c.h.b16 %v925
    %v1283 = vunpack.c.l.b16 %v926
    %v1284 = vunpack.c.l.b16 %v927
    %v1285 = vunpack.c.h.b16 %v927
    %v1286 = vunpack.c.l.b16 %v928
    %v1287 = vunpack.c.l.b16 %v929
    %v1288 = vunpack.c.h.b16 %v929
    %v1289 = vunpack.c.l.b16 %v930
    %v1290 = vunpack.c.l.b16 %v931
    %v1291 = vunpack.c.h.b16 %v931
    %v1292 = vunpack.c.l.b16 %v932
    %v1293 = vunpack.c.l.b16 %v933
    %v1294 = vunpack.c.h.b16 %v933
    %v1295 = vunpack.c.l.b16 %v934
    %v1296 = vunpack.c.l.b16 %v935
    %v1297 = vunpack.c.h.b16 %v935
    %v1298 = vunpack.c.l.b16 %v936
    %v1299 = vunpack.c.l.b16 %v937
    %v1300 = vunpack.c.h.b16 %v937
    %v1301 = vunpack.c.l.b16 %v938
    %v1302 = vunpack.c.l.b16 %v939
    %v1303 = vunpack.c.h.b16 %v939
    %v1304 = vunpack.c.l.b16 %v940
    %v1305 = vunpack.c.l.b16 %v941
    %v1306 = vunpack.c.h.b16 %v941
    %v1307 = vunpack.c.l.b16 %v942
    %v1308 = vunpack.c.l.b16 %v943
    %v1309 = vunpack.c.h.b16 %v943
    %v1310 = vunpack.c.l.b16 %v944
    %v1311 = vunpack.c.l.b16 %v945
    %v1312 = vunpack.c.h.b16 %v945
    %v1313 = vunpack.c.l.b16 %v946
    %v1314 = vunpack.c.l.b16 %v947
    %v1315 = vunpack.c.h.b16 %v947
    %v1316 = vunpack.c.l.b16 %v948
    %v1317 = vpack.c.b16 %v1104, %v1101
    %v1318 = vpack.c.b16 %v1105, %v1102
    %v1319 = vpack.c.b16 %v1106, %v1103
    %v1320 = vpack.c.b16 %v1110, %v1107
    %v1321 = vpack.c.b16 %v1111, %v1108
    %v1322 = vpack.c.b16 %v1112, %v1109
    %v1323 = vpack.c.b16 %v1116, %v1113
    %v1324 = vpack.c.b16 %v1117, %v1114
    %v1325 = vpack.c.b16 %v1118, %v1115
    %v1326 = vpack.c.b16 %v1122, %v1119
    %v1327 = vpack.c.b16 %v1123, %v1120
    %v1328 = vpack.c.b16 %v1124, %v1121
    %v1329 = vpack.c.b16 %v1128, %v1125
    %v1330 = vpack.c.b16 %v1129, %v1126
    %v1331 = vpack.c.b16 %v1130, %v1127
    %v1332 = vpack.c.b16 %v1134, %v1131
    %v1333 = vpack.c.b16 %v1135, %v1132
    %v1334 = vpack.c.b16 %v1136, %v1133
    %v1335 = vpack.c.b16 %v1140, %v1137
    %v1336 = vpack.c.b16 %v1141, %v1138
    %v1337 = vpack.c.b16 %v1142, %v1139
    %v1338 = vpack.c.b16 %v1146, %v1143
    %v1339 = vpack.c.b16 %v1147, %v1144
    %v1340 = vpack.c.b16 %v1148, %v1145
    %v1341 = vpack.c.b16 %v1152, %v1149
    %v1342 = vpack.c.b16 %v1153, %v1150
    %v1343 = vpack.c.b16 %v1154, %v1151
    %v1344 = vpack.c.b16 %v1158, %v1155
    %v1345 = vpack.c.b16 %v1159, %v1156
    %v1346 = vpack.c.b16 %v1160, %v1157
    %v1347 = vpack.c.b16 %v1164, %v1161
    %v1348 = vpack.c.b16 %v1165, %v1162
    %v1349 = vpack.c.b16 %v1166, %v1163
    %v1350 = vpack.c.b16 %v1170, %v1167
    %v1351 = vpack.c.b16 %v1171, %v1168
    %v1352 = vpack.c.b16 %v1172, %v1169
    %v1353 = vpack.c.b16 %v1176, %v1173
    %v1354 = vpack.c.b16 %v1177, %v1174
    %v1355 = vpack.c.b16 %v1178, %v1175
    %v1356 = vpack.c.b16 %v1182, %v1179
    %v1357 = vpack.c.b16 %v1183, %v1180
    %v1358 = vpack.c.b16 %v1184, %v1181
    %v1359 = vpack.c.b16 %v1188, %v1185
    %v1360 = vpack.c.b16 %v1189, %v1186
    %v1361 = vpack.c.b16 %v1190, %v1187
    %v1362 = vpack.c.b16 %v1194, %v1191
    %v1363 = vpack.c.b16 %v1195, %v1192
    %v1364 = vpack.c.b16 %v1196, %v1193
    %v1365 = vpack.c.b16 %v1200, %v1197
    %v1366 = vpack.c.b16 %v1201, %v1198
    %v1367 = vpack.c.b16 %v1202, %v1199
    %v1368 = vpack.c.b16 %v1206, %v1203
    %v1369 = vpack.c.b16 %v1207, %v1204
    %v1370 = vpack.c.b16 %v1208, %v1205
    %v1371 = vpack.c.b16 %v1212, %v1209
    %v1372 = vpack.c.b16 %v1213, %v1210
    %v1373 = vpack.c.b16 %v1214, %v1211
    %v1374 = vpack.c.b16 %v1218, %v1215
    %v1375 = vpack.c.b16 %v1219, %v1216
    %v1376 = vpack.c.b16 %v1220, %v1217
    %v1377 = vpack.c.b16 %v1224, %v1221
    %v1378 = vpack.c.b16 %v1225, %v1222
    %v1379 = vpack.c.b16 %v1226, %v1223
    %v1380 = vpack.c.b16 %v1230, %v1227
    %v1381 = vpack.c.b16 %v1231, %v1228
    %v1382 = vpack.c.b16 %v1232, %v1229
    %v1383 = vpack.c.b16 %v1236, %v1233
    %v1384 = vpack.c.b16 %v1237, %v1234
    %v1385 = vpack.c.b16 %v1238, %v1235
    %v1386 = vpack.c.b16 %v1242, %v1239
    %v1387 = vpack.c.b16 %v1243, %v1240
    %v1388 = vpack.c.b16 %v1244, %v1241
    %v1389 = vpack.c.b16 %v1248, %v1245
    %v1390 = vpack.c.b16 %v1249, %v1246
    %v1391 = vpack.c.b16 %v1250, %v1247
    %v1392 = vpack.c.b16 %v1254, %v1251
    %v1393 = vpack.c.b16 %v1255, %v1252
    %v1394 = vpack.c.b16 %v1256, %v1253
    %v1395 = vpack.c.b16 %v1260, %v1257
    %v1396 = vpack.c.b16 %v1261, %v1258
    %v1397 = vpack.c.b16 %v1262, %v1259
    %v1398 = vpack.c.b16 %v1266, %v1263
    %v1399 = vpack.c.b16 %v1267, %v1264
    %v1400 = vpack.c.b16 %v1268, %v1265
    %v1401 = vpack.c.b16 %v1272, %v1269
    %v1402 = vpack.c.b16 %v1273, %v1270
    %v1403 = vpack.c.b16 %v1274, %v1271
    %v1404 = vpack.c.b16 %v1278, %v1275
    %v1405 = vpack.c.b16 %v1279, %v1276
    %v1406 = vpack.c.b16 %v1280, %v1277
    %v1407 = vpack.c.b16 %v1284, %v1281
    %v1408 = vpack.c.b16 %v1285, %v1282
    %v1409 = vpack.c.b16 %v1286, %v1283
    %v1410 = vpack.c.b16 %v1290, %v1287
    %v1411 = vpack.c.b16 %v1291, %v1288
    %v1412 = vpack.c.b16 %v1292, %v1289
    %v1413 = vpack.c.b16 %v1296, %v1293
    %v1414 = vpack.c.b16 %v1297, %v1294
    %v1415 = vpack.c.b16 %v1298, %v1295
    %v1416 = vpack.c.b16 %v1302, %v1299
    %v1417 = vpack.c.b16 %v1303, %v1300
    %v1418 = vpack.c.b16 %v1304, %v1301
    %v1419 = vpack.c.b16 %v1308, %v1305
    %v1420 = vpack.c.b16 %v1309, %v1306
    %v1421 = vpack.c.b16 %v1310, %v1307
    %v1422 = vpack.c.b16 %v1314, %v1311
    %v1423 = vpack.c.b16 %v1315, %v1312
    %v1424 = vpack.c.b16 %v1316, %v1313
    %vm1533 = vcmask 523264
    %v1535 = vsel %vm1533, %v769, 0
    %v1538 = vsel %vm1533, %v774, 0
    %v1541 = vsel %vm1533, %v779, 0
    %v1544 = vsel %vm1533, %v784, 0
    %v1547 = vsel %vm1533, %v789, 0
    %v1550 = vsel %vm1533, %v794, 0
    %v1553 = vsel %vm1533, %v799, 0
    %v1556 = vsel %vm1533, %v804, 0
    %1558 = vmatpush.bf16.msra.mxu0 %v1338
    %1559 = vmatpush.bf16.msra.mxu0 %v1335
    %1560 = vmatpush.bf16.msra.mxu0 %v1332
    %1561 = vmatpush.bf16.msra.mxu0 %v1329
    %1562 = vmatpush.bf16.msra.mxu0 %v1326
    %1563 = vmatpush.bf16.msra.mxu0 %v1323
    %1564 = vmatpush.bf16.msra.mxu0 %v1320
    %1565 = vmatpush.bf16.msra.mxu0 %v1317
    %1566 = vmatmul.bf16.gmra.mxu0 %v765
    %v1567 = vpop.f32.mrf.mxu0
    %v1568 = vadd.f32 %v951, %v1567
    %v1569 = vpop.f32.mrf.mxu0
    %v1570 = vadd.f32 %v951, %v1569
    %1571 = vmatmul.bf16.gmra.mxu0 %v770
    %v1572 = vpop.f32.mrf.mxu0
    %v1573 = vadd.f32 %v951, %v1572
    %v1574 = vpop.f32.mrf.mxu0
    %v1575 = vadd.f32 %v951, %v1574
    %1576 = vmatmul.bf16.gmra.mxu0 %v775
    %v1577 = vpop.f32.mrf.mxu0
    %v1578 = vadd.f32 %v951, %v1577
    %v1579 = vpop.f32.mrf.mxu0
    %v1580 = vadd.f32 %v951, %v1579
    %1581 = vmatmul.bf16.gmra.mxu0 %v780
    %v1582 = vpop.f32.mrf.mxu0
    %v1583 = vadd.f32 %v951, %v1582
    %v1584 = vpop.f32.mrf.mxu0
    %v1585 = vadd.f32 %v951, %v1584
    %1586 = vmatmul.bf16.gmra.mxu0 %v785
    %v1587 = vpop.f32.mrf.mxu0
    %v1588 = vadd.f32 %v951, %v1587
    %v1589 = vpop.f32.mrf.mxu0
    %v1590 = vadd.f32 %v951, %v1589
    %1591 = vmatmul.bf16.gmra.mxu0 %v790
    %v1592 = vpop.f32.mrf.mxu0
    %v1593 = vadd.f32 %v951, %v1592
    %v1594 = vpop.f32.mrf.mxu0
    %v1595 = vadd.f32 %v951, %v1594
    %1596 = vmatmul.bf16.gmra.mxu0 %v795
    %v1597 = vpop.f32.mrf.mxu0
    %v1598 = vadd.f32 %v951, %v1597
    %v1599 = vpop.f32.mrf.mxu0
    %v1600 = vadd.f32 %v951, %v1599
    %1601 = vmatmul.bf16.gmra.mxu0 %v800
    %v1602 = vpop.f32.mrf.mxu0
    %v1603 = vadd.f32 %v951, %v1602
    %v1604 = vpop.f32.mrf.mxu0
    %v1605 = vadd.f32 %v951, %v1604
    %1606 = vdwg.mxu0
    %1607 = vmatpush.bf16.msra.mxu0 %v1362
    %1608 = vmatpush.bf16.msra.mxu0 %v1359
    %1609 = vmatpush.bf16.msra.mxu0 %v1356
    %1610 = vmatpush.bf16.msra.mxu0 %v1353
    %1611 = vmatpush.bf16.msra.mxu0 %v1350
    %1612 = vmatpush.bf16.msra.mxu0 %v1347
    %1613 = vmatpush.bf16.msra.mxu0 %v1344
    %1614 = vmatpush.bf16.msra.mxu0 %v1341
    %1615 = vmatmul.bf16.gmra.mxu0 %v766
    %v1616 = vpop.f32.mrf.mxu0
    %v1617 = vadd.f32 %v1568, %v1616
    %v1618 = vpop.f32.mrf.mxu0
    %v1619 = vadd.f32 %v1570, %v1618
    %1620 = vmatmul.bf16.gmra.mxu0 %v771
    %v1621 = vpop.f32.mrf.mxu0
    %v1622 = vadd.f32 %v1573, %v1621
    %v1623 = vpop.f32.mrf.mxu0
    %v1624 = vadd.f32 %v1575, %v1623
    %1625 = vmatmul.bf16.gmra.mxu0 %v776
    %v1626 = vpop.f32.mrf.mxu0
    %v1627 = vadd.f32 %v1578, %v1626
    %v1628 = vpop.f32.mrf.mxu0
    %v1629 = vadd.f32 %v1580, %v1628
    %1630 = vmatmul.bf16.gmra.mxu0 %v781
    %v1631 = vpop.f32.mrf.mxu0
    %v1632 = vadd.f32 %v1583, %v1631
    %v1633 = vpop.f32.mrf.mxu0
    %v1634 = vadd.f32 %v1585, %v1633
    %1635 = vmatmul.bf16.gmra.mxu0 %v786
    %v1636 = vpop.f32.mrf.mxu0
    %v1637 = vadd.f32 %v1588, %v1636
    %v1638 = vpop.f32.mrf.mxu0
    %v1639 = vadd.f32 %v1590, %v1638
    %1640 = vmatmul.bf16.gmra.mxu0 %v791
    %v1641 = vpop.f32.mrf.mxu0
    %v1642 = vadd.f32 %v1593, %v1641
    %v1643 = vpop.f32.mrf.mxu0
    %v1644 = vadd.f32 %v1595, %v1643
    %1645 = vmatmul.bf16.gmra.mxu0 %v796
    %v1646 = vpop.f32.mrf.mxu0
    %v1647 = vadd.f32 %v1598, %v1646
    %v1648 = vpop.f32.mrf.mxu0
    %v1649 = vadd.f32 %v1600, %v1648
    %1650 = vmatmul.bf16.gmra.mxu0 %v801
    %v1651 = vpop.f32.mrf.mxu0
    %v1652 = vadd.f32 %v1603, %v1651
    %v1653 = vpop.f32.mrf.mxu0
    %v1654 = vadd.f32 %v1605, %v1653
    %1655 = vdwg.mxu0
    %1656 = vmatpush.bf16.msra.mxu0 %v1386
    %1657 = vmatpush.bf16.msra.mxu0 %v1383
    %1658 = vmatpush.bf16.msra.mxu0 %v1380
    %1659 = vmatpush.bf16.msra.mxu0 %v1377
    %1660 = vmatpush.bf16.msra.mxu0 %v1374
    %1661 = vmatpush.bf16.msra.mxu0 %v1371
    %1662 = vmatpush.bf16.msra.mxu0 %v1368
    %1663 = vmatpush.bf16.msra.mxu0 %v1365
    %1664 = vmatmul.bf16.gmra.mxu0 %v767
    %v1665 = vpop.f32.mrf.mxu0
    %v1666 = vadd.f32 %v1617, %v1665
    %v1667 = vpop.f32.mrf.mxu0
    %v1668 = vadd.f32 %v1619, %v1667
    %1669 = vmatmul.bf16.gmra.mxu0 %v772
    %v1670 = vpop.f32.mrf.mxu0
    %v1671 = vadd.f32 %v1622, %v1670
    %v1672 = vpop.f32.mrf.mxu0
    %v1673 = vadd.f32 %v1624, %v1672
    %1674 = vmatmul.bf16.gmra.mxu0 %v777
    %v1675 = vpop.f32.mrf.mxu0
    %v1676 = vadd.f32 %v1627, %v1675
    %v1677 = vpop.f32.mrf.mxu0
    %v1678 = vadd.f32 %v1629, %v1677
    %1679 = vmatmul.bf16.gmra.mxu0 %v782
    %v1680 = vpop.f32.mrf.mxu0
    %v1681 = vadd.f32 %v1632, %v1680
    %v1682 = vpop.f32.mrf.mxu0
    %v1683 = vadd.f32 %v1634, %v1682
    %1684 = vmatmul.bf16.gmra.mxu0 %v787
    %v1685 = vpop.f32.mrf.mxu0
    %v1686 = vadd.f32 %v1637, %v1685
    %v1687 = vpop.f32.mrf.mxu0
    %v1688 = vadd.f32 %v1639, %v1687
    %1689 = vmatmul.bf16.gmra.mxu0 %v792
    %v1690 = vpop.f32.mrf.mxu0
    %v1691 = vadd.f32 %v1642, %v1690
    %v1692 = vpop.f32.mrf.mxu0
    %v1693 = vadd.f32 %v1644, %v1692
    %1694 = vmatmul.bf16.gmra.mxu0 %v797
    %v1695 = vpop.f32.mrf.mxu0
    %v1696 = vadd.f32 %v1647, %v1695
    %v1697 = vpop.f32.mrf.mxu0
    %v1698 = vadd.f32 %v1649, %v1697
    %1699 = vmatmul.bf16.gmra.mxu0 %v802
    %v1700 = vpop.f32.mrf.mxu0
    %v1701 = vadd.f32 %v1652, %v1700
    %v1702 = vpop.f32.mrf.mxu0
    %v1703 = vadd.f32 %v1654, %v1702
    %1704 = vdwg.mxu0
    %1705 = vmatpush.bf16.msra.mxu0 %v1410
    %1706 = vmatpush.bf16.msra.mxu0 %v1407
    %1707 = vmatpush.bf16.msra.mxu0 %v1404
    %1708 = vmatpush.bf16.msra.mxu0 %v1401
    %1709 = vmatpush.bf16.msra.mxu0 %v1398
    %1710 = vmatpush.bf16.msra.mxu0 %v1395
    %1711 = vmatpush.bf16.msra.mxu0 %v1392
    %1712 = vmatpush.bf16.msra.mxu0 %v1389
    %1713 = vmatmul.bf16.gmra.mxu0 %v768
    %v1714 = vpop.f32.mrf.mxu0
    %v1715 = vadd.f32 %v1666, %v1714
    %v1716 = vpop.f32.mrf.mxu0
    %v1717 = vadd.f32 %v1668, %v1716
    %1718 = vmatmul.bf16.gmra.mxu0 %v773
    %v1719 = vpop.f32.mrf.mxu0
    %v1720 = vadd.f32 %v1671, %v1719
    %v1721 = vpop.f32.mrf.mxu0
    %v1722 = vadd.f32 %v1673, %v1721
    %1723 = vmatmul.bf16.gmra.mxu0 %v778
    %v1724 = vpop.f32.mrf.mxu0
    %v1725 = vadd.f32 %v1676, %v1724
    %v1726 = vpop.f32.mrf.mxu0
    %v1727 = vadd.f32 %v1678, %v1726
    %1728 = vmatmul.bf16.gmra.mxu0 %v783
    %v1729 = vpop.f32.mrf.mxu0
    %v1730 = vadd.f32 %v1681, %v1729
    %v1731 = vpop.f32.mrf.mxu0
    %v1732 = vadd.f32 %v1683, %v1731
    %1733 = vmatmul.bf16.gmra.mxu0 %v788
    %v1734 = vpop.f32.mrf.mxu0
    %v1735 = vadd.f32 %v1686, %v1734
    %v1736 = vpop.f32.mrf.mxu0
    %v1737 = vadd.f32 %v1688, %v1736
    %1738 = vmatmul.bf16.gmra.mxu0 %v793
    %v1739 = vpop.f32.mrf.mxu0
    %v1740 = vadd.f32 %v1691, %v1739
    %v1741 = vpop.f32.mrf.mxu0
    %v1742 = vadd.f32 %v1693, %v1741
    %1743 = vmatmul.bf16.gmra.mxu0 %v798
    %v1744 = vpop.f32.mrf.mxu0
    %v1745 = vadd.f32 %v1696, %v1744
    %v1746 = vpop.f32.mrf.mxu0
    %v1747 = vadd.f32 %v1698, %v1746
    %1748 = vmatmul.bf16.gmra.mxu0 %v803
    %v1749 = vpop.f32.mrf.mxu0
    %v1750 = vadd.f32 %v1701, %v1749
    %v1751 = vpop.f32.mrf.mxu0
    %v1752 = vadd.f32 %v1703, %v1751
    %1753 = vdwg.mxu0
    %1754 = vmatpush.bf16.msra.mxu0 0
    %1755 = vmatpush.bf16.msra.mxu0 0
    %1756 = vmatpush.bf16.msra.mxu0 0
    %1757 = vmatpush.bf16.msra.mxu0 0
    %1758 = vmatpush.bf16.msra.mxu0 %v1422
    %1759 = vmatpush.bf16.msra.mxu0 %v1419
    %1760 = vmatpush.bf16.msra.mxu0 %v1416
    %1761 = vmatpush.bf16.msra.mxu0 %v1413
    %1762 = vmatmul.bf16.gmra.mxu0 %v1535
    %v1763 = vpop.f32.mrf.mxu0
    %v1764 = vadd.f32 %v1715, %v1763
    %v1765 = vpop.f32.mrf.mxu0
    %v1766 = vadd.f32 %v1717, %v1765
    %1767 = vmatmul.bf16.gmra.mxu0 %v1538
    %v1768 = vpop.f32.mrf.mxu0
    %v1769 = vadd.f32 %v1720, %v1768
    %v1770 = vpop.f32.mrf.mxu0
    %v1771 = vadd.f32 %v1722, %v1770
    %1772 = vmatmul.bf16.gmra.mxu0 %v1541
    %v1773 = vpop.f32.mrf.mxu0
    %v1774 = vadd.f32 %v1725, %v1773
    %v1775 = vpop.f32.mrf.mxu0
    %v1776 = vadd.f32 %v1727, %v1775
    %1777 = vmatmul.bf16.gmra.mxu0 %v1544
    %v1778 = vpop.f32.mrf.mxu0
    %v1779 = vadd.f32 %v1730, %v1778
    %v1780 = vpop.f32.mrf.mxu0
    %v1781 = vadd.f32 %v1732, %v1780
    %1782 = vmatmul.bf16.gmra.mxu0 %v1547
    %v1783 = vpop.f32.mrf.mxu0
    %v1784 = vadd.f32 %v1735, %v1783
    %v1785 = vpop.f32.mrf.mxu0
    %v1786 = vadd.f32 %v1737, %v1785
    %1787 = vmatmul.bf16.gmra.mxu0 %v1550
    %v1788 = vpop.f32.mrf.mxu0
    %v1789 = vadd.f32 %v1740, %v1788
    %v1790 = vpop.f32.mrf.mxu0
    %v1791 = vadd.f32 %v1742, %v1790
    %1792 = vmatmul.bf16.gmra.mxu0 %v1553
    %v1793 = vpop.f32.mrf.mxu0
    %v1794 = vadd.f32 %v1745, %v1793
    %v1795 = vpop.f32.mrf.mxu0
    %v1796 = vadd.f32 %v1747, %v1795
    %1797 = vmatmul.bf16.gmra.mxu0 %v1556
    %v1798 = vpop.f32.mrf.mxu0
    %v1799 = vadd.f32 %v1750, %v1798
    %v1800 = vpop.f32.mrf.mxu0
    %v1801 = vadd.f32 %v1752, %v1800
    %1802 = vdwg.mxu0
    %1803 = vmatpush.bf16.msra.mxu0 %v1339
    %1804 = vmatpush.bf16.msra.mxu0 %v1336
    %1805 = vmatpush.bf16.msra.mxu0 %v1333
    %1806 = vmatpush.bf16.msra.mxu0 %v1330
    %1807 = vmatpush.bf16.msra.mxu0 %v1327
    %1808 = vmatpush.bf16.msra.mxu0 %v1324
    %1809 = vmatpush.bf16.msra.mxu0 %v1321
    %1810 = vmatpush.bf16.msra.mxu0 %v1318
    %1811 = vmatmul.bf16.gmra.mxu0 %v765
    %v1812 = vpop.f32.mrf.mxu0
    %v1813 = vadd.f32 %v952, %v1812
    %v1814 = vpop.f32.mrf.mxu0
    %v1815 = vadd.f32 %v952, %v1814
    %1816 = vmatmul.bf16.gmra.mxu0 %v770
    %v1817 = vpop.f32.mrf.mxu0
    %v1818 = vadd.f32 %v952, %v1817
    %v1819 = vpop.f32.mrf.mxu0
    %v1820 = vadd.f32 %v952, %v1819
    %1821 = vmatmul.bf16.gmra.mxu0 %v775
    %v1822 = vpop.f32.mrf.mxu0
    %v1823 = vadd.f32 %v952, %v1822
    %v1824 = vpop.f32.mrf.mxu0
    %v1825 = vadd.f32 %v952, %v1824
    %1826 = vmatmul.bf16.gmra.mxu0 %v780
    %v1827 = vpop.f32.mrf.mxu0
    %v1828 = vadd.f32 %v952, %v1827
    %v1829 = vpop.f32.mrf.mxu0
    %v1830 = vadd.f32 %v952, %v1829
    %1831 = vmatmul.bf16.gmra.mxu0 %v785
    %v1832 = vpop.f32.mrf.mxu0
    %v1833 = vadd.f32 %v952, %v1832
    %v1834 = vpop.f32.mrf.mxu0
    %v1835 = vadd.f32 %v952, %v1834
    %1836 = vmatmul.bf16.gmra.mxu0 %v790
    %v1837 = vpop.f32.mrf.mxu0
    %v1838 = vadd.f32 %v952, %v1837
    %v1839 = vpop.f32.mrf.mxu0
    %v1840 = vadd.f32 %v952, %v1839
    %1841 = vmatmul.bf16.gmra.mxu0 %v795
    %v1842 = vpop.f32.mrf.mxu0
    %v1843 = vadd.f32 %v952, %v1842
    %v1844 = vpop.f32.mrf.mxu0
    %v1845 = vadd.f32 %v952, %v1844
    %1846 = vmatmul.bf16.gmra.mxu0 %v800
    %v1847 = vpop.f32.mrf.mxu0
    %v1848 = vadd.f32 %v952, %v1847
    %v1849 = vpop.f32.mrf.mxu0
    %v1850 = vadd.f32 %v952, %v1849
    %1851 = vdwg.mxu0
    %1852 = vmatpush.bf16.msra.mxu0 %v1363
    %1853 = vmatpush.bf16.msra.mxu0 %v1360
    %1854 = vmatpush.bf16.msra.mxu0 %v1357
    %1855 = vmatpush.bf16.msra.mxu0 %v1354
    %1856 = vmatpush.bf16.msra.mxu0 %v1351
    %1857 = vmatpush.bf16.msra.mxu0 %v1348
    %1858 = vmatpush.bf16.msra.mxu0 %v1345
    %1859 = vmatpush.bf16.msra.mxu0 %v1342
    %1860 = vmatmul.bf16.gmra.mxu0 %v766
    %v1861 = vpop.f32.mrf.mxu0
    %v1862 = vadd.f32 %v1813, %v1861
    %v1863 = vpop.f32.mrf.mxu0
    %v1864 = vadd.f32 %v1815, %v1863
    %1865 = vmatmul.bf16.gmra.mxu0 %v771
    %v1866 = vpop.f32.mrf.mxu0
    %v1867 = vadd.f32 %v1818, %v1866
    %v1868 = vpop.f32.mrf.mxu0
    %v1869 = vadd.f32 %v1820, %v1868
    %1870 = vmatmul.bf16.gmra.mxu0 %v776
    %v1871 = vpop.f32.mrf.mxu0
    %v1872 = vadd.f32 %v1823, %v1871
    %v1873 = vpop.f32.mrf.mxu0
    %v1874 = vadd.f32 %v1825, %v1873
    %1875 = vmatmul.bf16.gmra.mxu0 %v781
    %v1876 = vpop.f32.mrf.mxu0
    %v1877 = vadd.f32 %v1828, %v1876
    %v1878 = vpop.f32.mrf.mxu0
    %v1879 = vadd.f32 %v1830, %v1878
    %1880 = vmatmul.bf16.gmra.mxu0 %v786
    %v1881 = vpop.f32.mrf.mxu0
    %v1882 = vadd.f32 %v1833, %v1881
    %v1883 = vpop.f32.mrf.mxu0
    %v1884 = vadd.f32 %v1835, %v1883
    %1885 = vmatmul.bf16.gmra.mxu0 %v791
    %v1886 = vpop.f32.mrf.mxu0
    %v1887 = vadd.f32 %v1838, %v1886
    %v1888 = vpop.f32.mrf.mxu0
    %v1889 = vadd.f32 %v1840, %v1888
    %1890 = vmatmul.bf16.gmra.mxu0 %v796
    %v1891 = vpop.f32.mrf.mxu0
    %v1892 = vadd.f32 %v1843, %v1891
    %v1893 = vpop.f32.mrf.mxu0
    %v1894 = vadd.f32 %v1845, %v1893
    %1895 = vmatmul.bf16.gmra.mxu0 %v801
    %v1896 = vpop.f32.mrf.mxu0
    %v1897 = vadd.f32 %v1848, %v1896
    %v1898 = vpop.f32.mrf.mxu0
    %v1899 = vadd.f32 %v1850, %v1898
    %1900 = vdwg.mxu0
    %1901 = vmatpush.bf16.msra.mxu0 %v1387
    %1902 = vmatpush.bf16.msra.mxu0 %v1384
    %1903 = vmatpush.bf16.msra.mxu0 %v1381
    %1904 = vmatpush.bf16.msra.mxu0 %v1378
    %1905 = vmatpush.bf16.msra.mxu0 %v1375
    %1906 = vmatpush.bf16.msra.mxu0 %v1372
    %1907 = vmatpush.bf16.msra.mxu0 %v1369
    %1908 = vmatpush.bf16.msra.mxu0 %v1366
    %1909 = vmatmul.bf16.gmra.mxu0 %v767
    %v1910 = vpop.f32.mrf.mxu0
    %v1911 = vadd.f32 %v1862, %v1910
    %v1912 = vpop.f32.mrf.mxu0
    %v1913 = vadd.f32 %v1864, %v1912
    %1914 = vmatmul.bf16.gmra.mxu0 %v772
    %v1915 = vpop.f32.mrf.mxu0
    %v1916 = vadd.f32 %v1867, %v1915
    %v1917 = vpop.f32.mrf.mxu0
    %v1918 = vadd.f32 %v1869, %v1917
    %1919 = vmatmul.bf16.gmra.mxu0 %v777
    %v1920 = vpop.f32.mrf.mxu0
    %v1921 = vadd.f32 %v1872, %v1920
    %v1922 = vpop.f32.mrf.mxu0
    %v1923 = vadd.f32 %v1874, %v1922
    %1924 = vmatmul.bf16.gmra.mxu0 %v782
    %v1925 = vpop.f32.mrf.mxu0
    %v1926 = vadd.f32 %v1877, %v1925
    %v1927 = vpop.f32.mrf.mxu0
    %v1928 = vadd.f32 %v1879, %v1927
    %1929 = vmatmul.bf16.gmra.mxu0 %v787
    %v1930 = vpop.f32.mrf.mxu0
    %v1931 = vadd.f32 %v1882, %v1930
    %v1932 = vpop.f32.mrf.mxu0
    %v1933 = vadd.f32 %v1884, %v1932
    %1934 = vmatmul.bf16.gmra.mxu0 %v792
    %v1935 = vpop.f32.mrf.mxu0
    %v1936 = vadd.f32 %v1887, %v1935
    %v1937 = vpop.f32.mrf.mxu0
    %v1938 = vadd.f32 %v1889, %v1937
    %1939 = vmatmul.bf16.gmra.mxu0 %v797
    %v1940 = vpop.f32.mrf.mxu0
    %v1941 = vadd.f32 %v1892, %v1940
    %v1942 = vpop.f32.mrf.mxu0
    %v1943 = vadd.f32 %v1894, %v1942
    %1944 = vmatmul.bf16.gmra.mxu0 %v802
    %v1945 = vpop.f32.mrf.mxu0
    %v1946 = vadd.f32 %v1897, %v1945
    %v1947 = vpop.f32.mrf.mxu0
    %v1948 = vadd.f32 %v1899, %v1947
    %1949 = vdwg.mxu0
    %1950 = vmatpush.bf16.msra.mxu0 %v1411
    %1951 = vmatpush.bf16.msra.mxu0 %v1408
    %1952 = vmatpush.bf16.msra.mxu0 %v1405
    %1953 = vmatpush.bf16.msra.mxu0 %v1402
    %1954 = vmatpush.bf16.msra.mxu0 %v1399
    %1955 = vmatpush.bf16.msra.mxu0 %v1396
    %1956 = vmatpush.bf16.msra.mxu0 %v1393
    %1957 = vmatpush.bf16.msra.mxu0 %v1390
    %1958 = vmatmul.bf16.gmra.mxu0 %v768
    %v1959 = vpop.f32.mrf.mxu0
    %v1960 = vadd.f32 %v1911, %v1959
    %v1961 = vpop.f32.mrf.mxu0
    %v1962 = vadd.f32 %v1913, %v1961
    %1963 = vmatmul.bf16.gmra.mxu0 %v773
    %v1964 = vpop.f32.mrf.mxu0
    %v1965 = vadd.f32 %v1916, %v1964
    %v1966 = vpop.f32.mrf.mxu0
    %v1967 = vadd.f32 %v1918, %v1966
    %1968 = vmatmul.bf16.gmra.mxu0 %v778
    %v1969 = vpop.f32.mrf.mxu0
    %v1970 = vadd.f32 %v1921, %v1969
    %v1971 = vpop.f32.mrf.mxu0
    %v1972 = vadd.f32 %v1923, %v1971
    %1973 = vmatmul.bf16.gmra.mxu0 %v783
    %v1974 = vpop.f32.mrf.mxu0
    %v1975 = vadd.f32 %v1926, %v1974
    %v1976 = vpop.f32.mrf.mxu0
    %v1977 = vadd.f32 %v1928, %v1976
    %1978 = vmatmul.bf16.gmra.mxu0 %v788
    %v1979 = vpop.f32.mrf.mxu0
    %v1980 = vadd.f32 %v1931, %v1979
    %v1981 = vpop.f32.mrf.mxu0
    %v1982 = vadd.f32 %v1933, %v1981
    %1983 = vmatmul.bf16.gmra.mxu0 %v793
    %v1984 = vpop.f32.mrf.mxu0
    %v1985 = vadd.f32 %v1936, %v1984
    %v1986 = vpop.f32.mrf.mxu0
    %v1987 = vadd.f32 %v1938, %v1986
    %1988 = vmatmul.bf16.gmra.mxu0 %v798
    %v1989 = vpop.f32.mrf.mxu0
    %v1990 = vadd.f32 %v1941, %v1989
    %v1991 = vpop.f32.mrf.mxu0
    %v1992 = vadd.f32 %v1943, %v1991
    %1993 = vmatmul.bf16.gmra.mxu0 %v803
    %v1994 = vpop.f32.mrf.mxu0
    %v1995 = vadd.f32 %v1946, %v1994
    %v1996 = vpop.f32.mrf.mxu0
    %v1997 = vadd.f32 %v1948, %v1996
    %1998 = vdwg.mxu0
    %1999 = vmatpush.bf16.msra.mxu0 0
    %2000 = vmatpush.bf16.msra.mxu0 0
    %2001 = vmatpush.bf16.msra.mxu0 0
    %2002 = vmatpush.bf16.msra.mxu0 0
    %2003 = vmatpush.bf16.msra.mxu0 %v1423
    %2004 = vmatpush.bf16.msra.mxu0 %v1420
    %2005 = vmatpush.bf16.msra.mxu0 %v1417
    %2006 = vmatpush.bf16.msra.mxu0 %v1414
    %2007 = vmatmul.bf16.gmra.mxu0 %v1535
    %v2008 = vpop.f32.mrf.mxu0
    %v2009 = vadd.f32 %v1960, %v2008
    %v2010 = vpop.f32.mrf.mxu0
    %v2011 = vadd.f32 %v1962, %v2010
    %2012 = vmatmul.bf16.gmra.mxu0 %v1538
    %v2013 = vpop.f32.mrf.mxu0
    %v2014 = vadd.f32 %v1965, %v2013
    %v2015 = vpop.f32.mrf.mxu0
    %v2016 = vadd.f32 %v1967, %v2015
    %2017 = vmatmul.bf16.gmra.mxu0 %v1541
    %v2018 = vpop.f32.mrf.mxu0
    %v2019 = vadd.f32 %v1970, %v2018
    %v2020 = vpop.f32.mrf.mxu0
    %v2021 = vadd.f32 %v1972, %v2020
    %2022 = vmatmul.bf16.gmra.mxu0 %v1544
    %v2023 = vpop.f32.mrf.mxu0
    %v2024 = vadd.f32 %v1975, %v2023
    %v2025 = vpop.f32.mrf.mxu0
    %v2026 = vadd.f32 %v1977, %v2025
    %2027 = vmatmul.bf16.gmra.mxu0 %v1547
    %v2028 = vpop.f32.mrf.mxu0
    %v2029 = vadd.f32 %v1980, %v2028
    %v2030 = vpop.f32.mrf.mxu0
    %v2031 = vadd.f32 %v1982, %v2030
    %2032 = vmatmul.bf16.gmra.mxu0 %v1550
    %v2033 = vpop.f32.mrf.mxu0
    %v2034 = vadd.f32 %v1985, %v2033
    %v2035 = vpop.f32.mrf.mxu0
    %v2036 = vadd.f32 %v1987, %v2035
    %2037 = vmatmul.bf16.gmra.mxu0 %v1553
    %v2038 = vpop.f32.mrf.mxu0
    %v2039 = vadd.f32 %v1990, %v2038
    %v2040 = vpop.f32.mrf.mxu0
    %v2041 = vadd.f32 %v1992, %v2040
    %2042 = vmatmul.bf16.gmra.mxu0 %v1556
    %v2043 = vpop.f32.mrf.mxu0
    %v2044 = vadd.f32 %v1995, %v2043
    %v2045 = vpop.f32.mrf.mxu0
    %v2046 = vadd.f32 %v1997, %v2045
    %2047 = vdwg.mxu0
    %2048 = vmatpush.bf16.msra.mxu0 %v1340
    %2049 = vmatpush.bf16.msra.mxu0 %v1337
    %2050 = vmatpush.bf16.msra.mxu0 %v1334
    %2051 = vmatpush.bf16.msra.mxu0 %v1331
    %2052 = vmatpush.bf16.msra.mxu0 %v1328
    %2053 = vmatpush.bf16.msra.mxu0 %v1325
    %2054 = vmatpush.bf16.msra.mxu0 %v1322
    %2055 = vmatpush.bf16.msra.mxu0 %v1319
    %2056 = vmatmul.bf16.gmra.mxu0 %v765
    %v2057 = vpop.f32.mrf.mxu0
    %v2058 = vadd.f32 %v953, %v2057
    %v2059 = vpop.f32.mrf.mxu0
    %v2060 = vadd.f32 %v953, %v2059
    %2061 = vmatmul.bf16.gmra.mxu0 %v770
    %v2062 = vpop.f32.mrf.mxu0
    %v2063 = vadd.f32 %v953, %v2062
    %v2064 = vpop.f32.mrf.mxu0
    %v2065 = vadd.f32 %v953, %v2064
    %2066 = vmatmul.bf16.gmra.mxu0 %v775
    %v2067 = vpop.f32.mrf.mxu0
    %v2068 = vadd.f32 %v953, %v2067
    %v2069 = vpop.f32.mrf.mxu0
    %v2070 = vadd.f32 %v953, %v2069
    %2071 = vmatmul.bf16.gmra.mxu0 %v780
    %v2072 = vpop.f32.mrf.mxu0
    %v2073 = vadd.f32 %v953, %v2072
    %v2074 = vpop.f32.mrf.mxu0
    %v2075 = vadd.f32 %v953, %v2074
    %2076 = vmatmul.bf16.gmra.mxu0 %v785
    %v2077 = vpop.f32.mrf.mxu0
    %v2078 = vadd.f32 %v953, %v2077
    %v2079 = vpop.f32.mrf.mxu0
    %v2080 = vadd.f32 %v953, %v2079
    %2081 = vmatmul.bf16.gmra.mxu0 %v790
    %v2082 = vpop.f32.mrf.mxu0
    %v2083 = vadd.f32 %v953, %v2082
    %v2084 = vpop.f32.mrf.mxu0
    %v2085 = vadd.f32 %v953, %v2084
    %2086 = vmatmul.bf16.gmra.mxu0 %v795
    %v2087 = vpop.f32.mrf.mxu0
    %v2088 = vadd.f32 %v953, %v2087
    %v2089 = vpop.f32.mrf.mxu0
    %v2090 = vadd.f32 %v953, %v2089
    %2091 = vmatmul.bf16.gmra.mxu0 %v800
    %v2092 = vpop.f32.mrf.mxu0
    %v2093 = vadd.f32 %v953, %v2092
    %v2094 = vpop.f32.mrf.mxu0
    %v2095 = vadd.f32 %v953, %v2094
    %2096 = vdwg.mxu0
    %2097 = vmatpush.bf16.msra.mxu0 %v1364
    %2098 = vmatpush.bf16.msra.mxu0 %v1361
    %2099 = vmatpush.bf16.msra.mxu0 %v1358
    %2100 = vmatpush.bf16.msra.mxu0 %v1355
    %2101 = vmatpush.bf16.msra.mxu0 %v1352
    %2102 = vmatpush.bf16.msra.mxu0 %v1349
    %2103 = vmatpush.bf16.msra.mxu0 %v1346
    %2104 = vmatpush.bf16.msra.mxu0 %v1343
    %2105 = vmatmul.bf16.gmra.mxu0 %v766
    %v2106 = vpop.f32.mrf.mxu0
    %v2107 = vadd.f32 %v2058, %v2106
    %v2108 = vpop.f32.mrf.mxu0
    %v2109 = vadd.f32 %v2060, %v2108
    %2110 = vmatmul.bf16.gmra.mxu0 %v771
    %v2111 = vpop.f32.mrf.mxu0
    %v2112 = vadd.f32 %v2063, %v2111
    %v2113 = vpop.f32.mrf.mxu0
    %v2114 = vadd.f32 %v2065, %v2113
    %2115 = vmatmul.bf16.gmra.mxu0 %v776
    %v2116 = vpop.f32.mrf.mxu0
    %v2117 = vadd.f32 %v2068, %v2116
    %v2118 = vpop.f32.mrf.mxu0
    %v2119 = vadd.f32 %v2070, %v2118
    %2120 = vmatmul.bf16.gmra.mxu0 %v781
    %v2121 = vpop.f32.mrf.mxu0
    %v2122 = vadd.f32 %v2073, %v2121
    %v2123 = vpop.f32.mrf.mxu0
    %v2124 = vadd.f32 %v2075, %v2123
    %2125 = vmatmul.bf16.gmra.mxu0 %v786
    %v2126 = vpop.f32.mrf.mxu0
    %v2127 = vadd.f32 %v2078, %v2126
    %v2128 = vpop.f32.mrf.mxu0
    %v2129 = vadd.f32 %v2080, %v2128
    %2130 = vmatmul.bf16.gmra.mxu0 %v791
    %v2131 = vpop.f32.mrf.mxu0
    %v2132 = vadd.f32 %v2083, %v2131
    %v2133 = vpop.f32.mrf.mxu0
    %v2134 = vadd.f32 %v2085, %v2133
    %2135 = vmatmul.bf16.gmra.mxu0 %v796
    %v2136 = vpop.f32.mrf.mxu0
    %v2137 = vadd.f32 %v2088, %v2136
    %v2138 = vpop.f32.mrf.mxu0
    %v2139 = vadd.f32 %v2090, %v2138
    %2140 = vmatmul.bf16.gmra.mxu0 %v801
    %v2141 = vpop.f32.mrf.mxu0
    %v2142 = vadd.f32 %v2093, %v2141
    %v2143 = vpop.f32.mrf.mxu0
    %v2144 = vadd.f32 %v2095, %v2143
    %2145 = vdwg.mxu0
    %2146 = vmatpush.bf16.msra.mxu0 %v1388
    %2147 = vmatpush.bf16.msra.mxu0 %v1385
    %2148 = vmatpush.bf16.msra.mxu0 %v1382
    %2149 = vmatpush.bf16.msra.mxu0 %v1379
    %2150 = vmatpush.bf16.msra.mxu0 %v1376
    %2151 = vmatpush.bf16.msra.mxu0 %v1373
    %2152 = vmatpush.bf16.msra.mxu0 %v1370
    %2153 = vmatpush.bf16.msra.mxu0 %v1367
    %2154 = vmatmul.bf16.gmra.mxu0 %v767
    %v2155 = vpop.f32.mrf.mxu0
    %v2156 = vadd.f32 %v2107, %v2155
    %v2157 = vpop.f32.mrf.mxu0
    %v2158 = vadd.f32 %v2109, %v2157
    %2159 = vmatmul.bf16.gmra.mxu0 %v772
    %v2160 = vpop.f32.mrf.mxu0
    %v2161 = vadd.f32 %v2112, %v2160
    %v2162 = vpop.f32.mrf.mxu0
    %v2163 = vadd.f32 %v2114, %v2162
    %2164 = vmatmul.bf16.gmra.mxu0 %v777
    %v2165 = vpop.f32.mrf.mxu0
    %v2166 = vadd.f32 %v2117, %v2165
    %v2167 = vpop.f32.mrf.mxu0
    %v2168 = vadd.f32 %v2119, %v2167
    %2169 = vmatmul.bf16.gmra.mxu0 %v782
    %v2170 = vpop.f32.mrf.mxu0
    %v2171 = vadd.f32 %v2122, %v2170
    %v2172 = vpop.f32.mrf.mxu0
    %v2173 = vadd.f32 %v2124, %v2172
    %2174 = vmatmul.bf16.gmra.mxu0 %v787
    %v2175 = vpop.f32.mrf.mxu0
    %v2176 = vadd.f32 %v2127, %v2175
    %v2177 = vpop.f32.mrf.mxu0
    %v2178 = vadd.f32 %v2129, %v2177
    %2179 = vmatmul.bf16.gmra.mxu0 %v792
    %v2180 = vpop.f32.mrf.mxu0
    %v2181 = vadd.f32 %v2132, %v2180
    %v2182 = vpop.f32.mrf.mxu0
    %v2183 = vadd.f32 %v2134, %v2182
    %2184 = vmatmul.bf16.gmra.mxu0 %v797
    %v2185 = vpop.f32.mrf.mxu0
    %v2186 = vadd.f32 %v2137, %v2185
    %v2187 = vpop.f32.mrf.mxu0
    %v2188 = vadd.f32 %v2139, %v2187
    %2189 = vmatmul.bf16.gmra.mxu0 %v802
    %v2190 = vpop.f32.mrf.mxu0
    %v2191 = vadd.f32 %v2142, %v2190
    %v2192 = vpop.f32.mrf.mxu0
    %v2193 = vadd.f32 %v2144, %v2192
    %2194 = vdwg.mxu0
    %2195 = vmatpush.bf16.msra.mxu0 %v1412
    %2196 = vmatpush.bf16.msra.mxu0 %v1409
    %2197 = vmatpush.bf16.msra.mxu0 %v1406
    %2198 = vmatpush.bf16.msra.mxu0 %v1403
    %2199 = vmatpush.bf16.msra.mxu0 %v1400
    %2200 = vmatpush.bf16.msra.mxu0 %v1397
    %2201 = vmatpush.bf16.msra.mxu0 %v1394
    %2202 = vmatpush.bf16.msra.mxu0 %v1391
    %2203 = vmatmul.bf16.gmra.mxu0 %v768
    %v2204 = vpop.f32.mrf.mxu0
    %v2205 = vadd.f32 %v2156, %v2204
    %v2206 = vpop.f32.mrf.mxu0
    %v2207 = vadd.f32 %v2158, %v2206
    %2208 = vmatmul.bf16.gmra.mxu0 %v773
    %v2209 = vpop.f32.mrf.mxu0
    %v2210 = vadd.f32 %v2161, %v2209
    %v2211 = vpop.f32.mrf.mxu0
    %v2212 = vadd.f32 %v2163, %v2211
    %2213 = vmatmul.bf16.gmra.mxu0 %v778
    %v2214 = vpop.f32.mrf.mxu0
    %v2215 = vadd.f32 %v2166, %v2214
    %v2216 = vpop.f32.mrf.mxu0
    %v2217 = vadd.f32 %v2168, %v2216
    %2218 = vmatmul.bf16.gmra.mxu0 %v783
    %v2219 = vpop.f32.mrf.mxu0
    %v2220 = vadd.f32 %v2171, %v2219
    %v2221 = vpop.f32.mrf.mxu0
    %v2222 = vadd.f32 %v2173, %v2221
    %2223 = vmatmul.bf16.gmra.mxu0 %v788
    %v2224 = vpop.f32.mrf.mxu0
    %v2225 = vadd.f32 %v2176, %v2224
    %v2226 = vpop.f32.mrf.mxu0
    %v2227 = vadd.f32 %v2178, %v2226
    %2228 = vmatmul.bf16.gmra.mxu0 %v793
    %v2229 = vpop.f32.mrf.mxu0
    %v2230 = vadd.f32 %v2181, %v2229
    %v2231 = vpop.f32.mrf.mxu0
    %v2232 = vadd.f32 %v2183, %v2231
    %2233 = vmatmul.bf16.gmra.mxu0 %v798
    %v2234 = vpop.f32.mrf.mxu0
    %v2235 = vadd.f32 %v2186, %v2234
    %v2236 = vpop.f32.mrf.mxu0
    %v2237 = vadd.f32 %v2188, %v2236
    %2238 = vmatmul.bf16.gmra.mxu0 %v803
    %v2239 = vpop.f32.mrf.mxu0
    %v2240 = vadd.f32 %v2191, %v2239
    %v2241 = vpop.f32.mrf.mxu0
    %v2242 = vadd.f32 %v2193, %v2241
    %2243 = vdwg.mxu0
    %2244 = vmatpush.bf16.msra.mxu0 0
    %2245 = vmatpush.bf16.msra.mxu0 0
    %2246 = vmatpush.bf16.msra.mxu0 0
    %2247 = vmatpush.bf16.msra.mxu0 0
    %2248 = vmatpush.bf16.msra.mxu0 %v1424
    %2249 = vmatpush.bf16.msra.mxu0 %v1421
    %2250 = vmatpush.bf16.msra.mxu0 %v1418
    %2251 = vmatpush.bf16.msra.mxu0 %v1415
    %2252 = vmatmul.bf16.gmra.mxu0 %v1535
    %v2253 = vpop.f32.mrf.mxu0
    %v2254 = vadd.f32 %v2205, %v2253
    %v2255 = vpop.f32.mrf.mxu0
    %v2256 = vadd.f32 %v2207, %v2255
    %2257 = vmatmul.bf16.gmra.mxu0 %v1538
    %v2258 = vpop.f32.mrf.mxu0
    %v2259 = vadd.f32 %v2210, %v2258
    %v2260 = vpop.f32.mrf.mxu0
    %v2261 = vadd.f32 %v2212, %v2260
    %2262 = vmatmul.bf16.gmra.mxu0 %v1541
    %v2263 = vpop.f32.mrf.mxu0
    %v2264 = vadd.f32 %v2215, %v2263
    %v2265 = vpop.f32.mrf.mxu0
    %v2266 = vadd.f32 %v2217, %v2265
    %2267 = vmatmul.bf16.gmra.mxu0 %v1544
    %v2268 = vpop.f32.mrf.mxu0
    %v2269 = vadd.f32 %v2220, %v2268
    %v2270 = vpop.f32.mrf.mxu0
    %v2271 = vadd.f32 %v2222, %v2270
    %2272 = vmatmul.bf16.gmra.mxu0 %v1547
    %v2273 = vpop.f32.mrf.mxu0
    %v2274 = vadd.f32 %v2225, %v2273
    %v2275 = vpop.f32.mrf.mxu0
    %v2276 = vadd.f32 %v2227, %v2275
    %2277 = vmatmul.bf16.gmra.mxu0 %v1550
    %v2278 = vpop.f32.mrf.mxu0
    %v2279 = vadd.f32 %v2230, %v2278
    %v2280 = vpop.f32.mrf.mxu0
    %v2281 = vadd.f32 %v2232, %v2280
    %2282 = vmatmul.bf16.gmra.mxu0 %v1553
    %v2283 = vpop.f32.mrf.mxu0
    %v2284 = vadd.f32 %v2235, %v2283
    %v2285 = vpop.f32.mrf.mxu0
    %v2286 = vadd.f32 %v2237, %v2285
    %2287 = vmatmul.bf16.gmra.mxu0 %v1556
    %v2288 = vpop.f32.mrf.mxu0
    %v2289 = vadd.f32 %v2240, %v2288
    %v2290 = vpop.f32.mrf.mxu0
    %v2291 = vadd.f32 %v2242, %v2290
    %2292 = vdwg.mxu0
    %vm2293 = vcmp.ge.f32.partialorder %v1764, 0.0
    %vm2294 = vcmp.ge.f32.partialorder %v2009, 0.0
    %vm2295 = vcmp.ge.f32.partialorder %v2254, 0.0
    %vm2296 = vcmp.ge.f32.partialorder %v1766, 0.0
    %vm2297 = vcmp.ge.f32.partialorder %v2011, 0.0
    %vm2298 = vcmp.ge.f32.partialorder %v2256, 0.0
    %vm2299 = vcmp.ge.f32.partialorder %v1769, 0.0
    %vm2300 = vcmp.ge.f32.partialorder %v2014, 0.0
    %vm2301 = vcmp.ge.f32.partialorder %v2259, 0.0
    %vm2302 = vcmp.ge.f32.partialorder %v1771, 0.0
    %vm2303 = vcmp.ge.f32.partialorder %v2016, 0.0
    %vm2304 = vcmp.ge.f32.partialorder %v2261, 0.0
    %vm2305 = vcmp.ge.f32.partialorder %v1774, 0.0
    %vm2306 = vcmp.ge.f32.partialorder %v2019, 0.0
    %vm2307 = vcmp.ge.f32.partialorder %v2264, 0.0
    %vm2308 = vcmp.ge.f32.partialorder %v1776, 0.0
    %vm2309 = vcmp.ge.f32.partialorder %v2021, 0.0
    %vm2310 = vcmp.ge.f32.partialorder %v2266, 0.0
    %vm2311 = vcmp.ge.f32.partialorder %v1779, 0.0
    %vm2312 = vcmp.ge.f32.partialorder %v2024, 0.0
    %vm2313 = vcmp.ge.f32.partialorder %v2269, 0.0
    %vm2314 = vcmp.ge.f32.partialorder %v1781, 0.0
    %vm2315 = vcmp.ge.f32.partialorder %v2026, 0.0
    %vm2316 = vcmp.ge.f32.partialorder %v2271, 0.0
    %vm2317 = vcmp.ge.f32.partialorder %v1784, 0.0
    %vm2318 = vcmp.ge.f32.partialorder %v2029, 0.0
    %vm2319 = vcmp.ge.f32.partialorder %v2274, 0.0
    %vm2320 = vcmp.ge.f32.partialorder %v1786, 0.0
    %vm2321 = vcmp.ge.f32.partialorder %v2031, 0.0
    %vm2322 = vcmp.ge.f32.partialorder %v2276, 0.0
    %vm2323 = vcmp.ge.f32.partialorder %v1789, 0.0
    %vm2324 = vcmp.ge.f32.partialorder %v2034, 0.0
    %vm2325 = vcmp.ge.f32.partialorder %v2279, 0.0
    %vm2326 = vcmp.ge.f32.partialorder %v1791, 0.0
    %vm2327 = vcmp.ge.f32.partialorder %v2036, 0.0
    %vm2328 = vcmp.ge.f32.partialorder %v2281, 0.0
    %vm2329 = vcmp.ge.f32.partialorder %v1794, 0.0
    %vm2330 = vcmp.ge.f32.partialorder %v2039, 0.0
    %vm2331 = vcmp.ge.f32.partialorder %v2284, 0.0
    %vm2332 = vcmp.ge.f32.partialorder %v1796, 0.0
    %vm2333 = vcmp.ge.f32.partialorder %v2041, 0.0
    %vm2334 = vcmp.ge.f32.partialorder %v2286, 0.0
    %vm2335 = vcmp.ge.f32.partialorder %v1799, 0.0
    %vm2336 = vcmp.ge.f32.partialorder %v2044, 0.0
    %vm2337 = vcmp.ge.f32.partialorder %v2289, 0.0
    %vm2338 = vcmp.ge.f32.partialorder %v1801, 0.0
    %vm2339 = vcmp.ge.f32.partialorder %v2046, 0.0
    %vm2340 = vcmp.ge.f32.partialorder %v2291, 0.0
    %v2341 = vstv %s69
    %v2342 = vmul.f32 %v2341, %v1764
    %v2343 = vmul.f32 %v2341, %v2009
    %v2344 = vmul.f32 %v2341, %v2254
    %v2345 = vmul.f32 %v2341, %v1766
    %v2346 = vmul.f32 %v2341, %v2011
    %v2347 = vmul.f32 %v2341, %v2256
    %v2348 = vmul.f32 %v2341, %v1769
    %v2349 = vmul.f32 %v2341, %v2014
    %v2350 = vmul.f32 %v2341, %v2259
    %v2351 = vmul.f32 %v2341, %v1771
    %v2352 = vmul.f32 %v2341, %v2016
    %v2353 = vmul.f32 %v2341, %v2261
    %v2354 = vmul.f32 %v2341, %v1774
    %v2355 = vmul.f32 %v2341, %v2019
    %v2356 = vmul.f32 %v2341, %v2264
    %v2357 = vmul.f32 %v2341, %v1776
    %v2358 = vmul.f32 %v2341, %v2021
    %v2359 = vmul.f32 %v2341, %v2266
    %v2360 = vmul.f32 %v2341, %v1779
    %v2361 = vmul.f32 %v2341, %v2024
    %v2362 = vmul.f32 %v2341, %v2269
    %v2363 = vmul.f32 %v2341, %v1781
    %v2364 = vmul.f32 %v2341, %v2026
    %v2365 = vmul.f32 %v2341, %v2271
    %v2366 = vmul.f32 %v2341, %v1784
    %v2367 = vmul.f32 %v2341, %v2029
    %v2368 = vmul.f32 %v2341, %v2274
    %v2369 = vmul.f32 %v2341, %v1786
    %v2370 = vmul.f32 %v2341, %v2031
    %v2371 = vmul.f32 %v2341, %v2276
    %v2372 = vmul.f32 %v2341, %v1789
    %v2373 = vmul.f32 %v2341, %v2034
    %v2374 = vmul.f32 %v2341, %v2279
    %v2375 = vmul.f32 %v2341, %v1791
    %v2376 = vmul.f32 %v2341, %v2036
    %v2377 = vmul.f32 %v2341, %v2281
    %v2378 = vmul.f32 %v2341, %v1794
    %v2379 = vmul.f32 %v2341, %v2039
    %v2380 = vmul.f32 %v2341, %v2284
    %v2381 = vmul.f32 %v2341, %v1796
    %v2382 = vmul.f32 %v2341, %v2041
    %v2383 = vmul.f32 %v2341, %v2286
    %v2384 = vmul.f32 %v2341, %v1799
    %v2385 = vmul.f32 %v2341, %v2044
    %v2386 = vmul.f32 %v2341, %v2289
    %v2387 = vmul.f32 %v2341, %v1801
    %v2388 = vmul.f32 %v2341, %v2046
    %v2389 = vmul.f32 %v2341, %v2291
    %v2390 = vsel %vm2293, %v1764, %v2342
    %v2391 = vsel %vm2294, %v2009, %v2343
    %v2392 = vsel %vm2295, %v2254, %v2344
    %v2393 = vsel %vm2296, %v1766, %v2345
    %v2394 = vsel %vm2297, %v2011, %v2346
    %v2395 = vsel %vm2298, %v2256, %v2347
    %v2396 = vsel %vm2299, %v1769, %v2348
    %v2397 = vsel %vm2300, %v2014, %v2349
    %v2398 = vsel %vm2301, %v2259, %v2350
    %v2399 = vsel %vm2302, %v1771, %v2351
    %v2400 = vsel %vm2303, %v2016, %v2352
    %v2401 = vsel %vm2304, %v2261, %v2353
    %v2402 = vsel %vm2305, %v1774, %v2354
    %v2403 = vsel %vm2306, %v2019, %v2355
    %v2404 = vsel %vm2307, %v2264, %v2356
    %v2405 = vsel %vm2308, %v1776, %v2357
    %v2406 = vsel %vm2309, %v2021, %v2358
    %v2407 = vsel %vm2310, %v2266, %v2359
    %v2408 = vsel %vm2311, %v1779, %v2360
    %v2409 = vsel %vm2312, %v2024, %v2361
    %v2410 = vsel %vm2313, %v2269, %v2362
    %v2411 = vsel %vm2314, %v1781, %v2363
    %v2412 = vsel %vm2315, %v2026, %v2364
    %v2413 = vsel %vm2316, %v2271, %v2365
    %v2414 = vsel %vm2317, %v1784, %v2366
    %v2415 = vsel %vm2318, %v2029, %v2367
    %v2416 = vsel %vm2319, %v2274, %v2368
    %v2417 = vsel %vm2320, %v1786, %v2369
    %v2418 = vsel %vm2321, %v2031, %v2370
    %v2419 = vsel %vm2322, %v2276, %v2371
    %v2420 = vsel %vm2323, %v1789, %v2372
    %v2421 = vsel %vm2324, %v2034, %v2373
    %v2422 = vsel %vm2325, %v2279, %v2374
    %v2423 = vsel %vm2326, %v1791, %v2375
    %v2424 = vsel %vm2327, %v2036, %v2376
    %v2425 = vsel %vm2328, %v2281, %v2377
    %v2426 = vsel %vm2329, %v1794, %v2378
    %v2427 = vsel %vm2330, %v2039, %v2379
    %v2428 = vsel %vm2331, %v2284, %v2380
    %v2429 = vsel %vm2332, %v1796, %v2381
    %v2430 = vsel %vm2333, %v2041, %v2382
    %v2431 = vsel %vm2334, %v2286, %v2383
    %v2432 = vsel %vm2335, %v1799, %v2384
    %v2433 = vsel %vm2336, %v2044, %v2385
    %v2434 = vsel %vm2337, %v2289, %v2386
    %v2435 = vsel %vm2338, %v1801, %v2387
    %v2436 = vsel %vm2339, %v2046, %v2388
    %v2437 = vsel %vm2340, %v2291, %v2389
    %v2438 = vld [vmem:[%s5] sm:$0xff]
    %v2439 = vld [vmem:[%s5 + $0x8] sm:$0xff]
    %v2440 = vld [vmem:[%s5 + $0x10] sm:$0xff]
    %v2441 = vld [vmem:[%s5 + $0x18] sm:$0xff]
    %v2442 = vld [vmem:[%s5 + $0x20] sm:$0xff]
    %v2443 = vld [vmem:[%s5 + $0x28] sm:$0xff]
    %v2444 = vld [vmem:[%s5 + $0x30] sm:$0xff]
    %v2445 = vld [vmem:[%s5 + $0x38] sm:$0xff]
    %v2446 = vld [vmem:[%s5 + $0x40] sm:$0xff]
    %v2447 = vld [vmem:[%s5 + $0x48] sm:$0xff]
    %v2448 = vld [vmem:[%s5 + $0x50] sm:$0xff]
    %v2449 = vld [vmem:[%s5 + $0x58] sm:$0xff]
    %v2450 = vld [vmem:[%s5 + $0x60] sm:$0xff]
    %v2451 = vld [vmem:[%s5 + $0x68] sm:$0xff]
    %v2452 = vld [vmem:[%s5 + $0x70] sm:$0xff]
    %v2453 = vld [vmem:[%s5 + $0x78] sm:$0xff]
    %v2454 = vld [vmem:[%s5 + $0x80] sm:$0xff]
    %v2455 = vld [vmem:[%s5 + $0x88] sm:$0xff]
    %v2456 = vld [vmem:[%s5 + $0x90] sm:$0xff]
    %v2457 = vld [vmem:[%s5 + $0x98] sm:$0xff]
    %v2458 = vld [vmem:[%s5 + $0xa0] sm:$0xff]
    %v2459 = vld [vmem:[%s5 + $0xa8] sm:$0xff]
    %v2460 = vld [vmem:[%s5 + $0xb0] sm:$0xff]
    %v2461 = vld [vmem:[%s5 + $0xb8] sm:$0xff]
    %v2462 = vld [vmem:[%s5 + $0xc0] sm:$0xff]
    %v2463 = vld [vmem:[%s5 + $0xc8] sm:$0xff]
    %v2464 = vld [vmem:[%s5 + $0xd0] sm:$0xff]
    %v2465 = vld [vmem:[%s5 + $0xd8] sm:$0xff]
    %v2466 = vld [vmem:[%s5 + $0xe0] sm:$0xff]
    %v2467 = vld [vmem:[%s5 + $0xe8] sm:$0xff]
    %v2468 = vld [vmem:[%s5 + $0xf0] sm:$0xff]
    %v2469 = vld [vmem:[%s5 + $0xf8] sm:$0xff]
    %v2470 = vld [vmem:[%s5 + $0x100] sm:$0xff]
    %v2471 = vld [vmem:[%s5 + $0x108] sm:$0xff]
    %v2472 = vld [vmem:[%s5 + $0x110] sm:$0xff]
    %v2473 = vld [vmem:[%s5 + $0x118] sm:$0xff]
    %v2474 = vld [vmem:[%s5 + $0x120] sm:$0xff]
    %v2475 = vld [vmem:[%s5 + $0x128] sm:$0xff]
    %v2476 = vld [vmem:[%s5 + $0x130] sm:$0xff]
    %v2477 = vld [vmem:[%s5 + $0x138] sm:$0xff]
    %v2478 = vld [vmem:[%s5 + $0x140] sm:$0xff]
    %v2479 = vld [vmem:[%s5 + $0x148] sm:$0xff]
    %v2480 = vld [vmem:[%s5 + $0x150] sm:$0xff]
    %v2481 = vld [vmem:[%s5 + $0x158] sm:$0xff]
    %v2482 = vld [vmem:[%s5 + $0x160] sm:$0xff]
    %v2483 = vld [vmem:[%s5 + $0x168] sm:$0xff]
    %v2484 = vld [vmem:[%s5 + $0x170] sm:$0xff]
    %v2485 = vld [vmem:[%s5 + $0x178] sm:$0xff]
    %v2486 = vld [vmem:[%s6] sm:$0x1]
    %v2488 = vperm.slane %v2486, 0
    %2490 = vmatpush.msra.mxu0 %v2453
    %2491 = vmatpush.msra.mxu0 %v2452
    %2492 = vmatpush.msra.mxu0 %v2451
    %2493 = vmatpush.msra.mxu0 %v2450
    %2494 = vmatpush.msra.mxu0 %v2449
    %2495 = vmatpush.msra.mxu0 %v2448
    %2496 = vmatpush.msra.mxu0 %v2447
    %2497 = vmatpush.msra.mxu0 %v2446
    %2498 = vmatpush.msra.mxu0 %v2445
    %2499 = vmatpush.msra.mxu0 %v2444
    %2500 = vmatpush.msra.mxu0 %v2443
    %2501 = vmatpush.msra.mxu0 %v2442
    %2502 = vmatpush.msra.mxu0 %v2441
    %2503 = vmatpush.msra.mxu0 %v2440
    %2504 = vmatpush.msra.mxu0 %v2439
    %2505 = vmatpush.msra.mxu0 %v2438
    %2506 = vmatmul.f32.gmra.mxu0 %v2390
    %v2507 = vpop.f32.mrf.mxu0
    %v2508 = vadd.f32 %v2488, %v2507
    %2509 = vmatmul.f32.gmra.mxu0 %v2393
    %v2510 = vpop.f32.mrf.mxu0
    %v2511 = vadd.f32 %v2488, %v2510
    %2512 = vmatmul.f32.gmra.mxu0 %v2396
    %v2513 = vpop.f32.mrf.mxu0
    %v2514 = vadd.f32 %v2488, %v2513
    %2515 = vmatmul.f32.gmra.mxu0 %v2399
    %v2516 = vpop.f32.mrf.mxu0
    %v2517 = vadd.f32 %v2488, %v2516
    %2518 = vmatmul.f32.gmra.mxu0 %v2402
    %v2519 = vpop.f32.mrf.mxu0
    %v2520 = vadd.f32 %v2488, %v2519
    %2521 = vmatmul.f32.gmra.mxu0 %v2405
    %v2522 = vpop.f32.mrf.mxu0
    %v2523 = vadd.f32 %v2488, %v2522
    %2524 = vmatmul.f32.gmra.mxu0 %v2408
    %v2525 = vpop.f32.mrf.mxu0
    %v2526 = vadd.f32 %v2488, %v2525
    %2527 = vmatmul.f32.gmra.mxu0 %v2411
    %v2528 = vpop.f32.mrf.mxu0
    %v2529 = vadd.f32 %v2488, %v2528
    %2530 = vmatmul.f32.gmra.mxu0 %v2414
    %v2531 = vpop.f32.mrf.mxu0
    %v2532 = vadd.f32 %v2488, %v2531
    %2533 = vmatmul.f32.gmra.mxu0 %v2417
    %v2534 = vpop.f32.mrf.mxu0
    %v2535 = vadd.f32 %v2488, %v2534
    %2536 = vmatmul.f32.gmra.mxu0 %v2420
    %v2537 = vpop.f32.mrf.mxu0
    %v2538 = vadd.f32 %v2488, %v2537
    %2539 = vmatmul.f32.gmra.mxu0 %v2423
    %v2540 = vpop.f32.mrf.mxu0
    %v2541 = vadd.f32 %v2488, %v2540
    %2542 = vmatmul.f32.gmra.mxu0 %v2426
    %v2543 = vpop.f32.mrf.mxu0
    %v2544 = vadd.f32 %v2488, %v2543
    %2545 = vmatmul.f32.gmra.mxu0 %v2429
    %v2546 = vpop.f32.mrf.mxu0
    %v2547 = vadd.f32 %v2488, %v2546
    %2548 = vmatmul.f32.gmra.mxu0 %v2432
    %v2549 = vpop.f32.mrf.mxu0
    %v2550 = vadd.f32 %v2488, %v2549
    %2551 = vmatmul.f32.gmra.mxu0 %v2435
    %v2552 = vpop.f32.mrf.mxu0
    %v2553 = vadd.f32 %v2488, %v2552
    %2554 = vdwg.mxu0
    %2555 = vmatpush.msra.mxu0 %v2469
    %2556 = vmatpush.msra.mxu0 %v2468
    %2557 = vmatpush.msra.mxu0 %v2467
    %2558 = vmatpush.msra.mxu0 %v2466
    %2559 = vmatpush.msra.mxu0 %v2465
    %2560 = vmatpush.msra.mxu0 %v2464
    %2561 = vmatpush.msra.mxu0 %v2463
    %2562 = vmatpush.msra.mxu0 %v2462
    %2563 = vmatpush.msra.mxu0 %v2461
    %2564 = vmatpush.msra.mxu0 %v2460
    %2565 = vmatpush.msra.mxu0 %v2459
    %2566 = vmatpush.msra.mxu0 %v2458
    %2567 = vmatpush.msra.mxu0 %v2457
    %2568 = vmatpush.msra.mxu0 %v2456
    %2569 = vmatpush.msra.mxu0 %v2455
    %2570 = vmatpush.msra.mxu0 %v2454
    %2571 = vmatmul.f32.gmra.mxu0 %v2391
    %v2572 = vpop.f32.mrf.mxu0
    %v2573 = vadd.f32 %v2508, %v2572
    %2574 = vmatmul.f32.gmra.mxu0 %v2394
    %v2575 = vpop.f32.mrf.mxu0
    %v2576 = vadd.f32 %v2511, %v2575
    %2577 = vmatmul.f32.gmra.mxu0 %v2397
    %v2578 = vpop.f32.mrf.mxu0
    %v2579 = vadd.f32 %v2514, %v2578
    %2580 = vmatmul.f32.gmra.mxu0 %v2400
    %v2581 = vpop.f32.mrf.mxu0
    %v2582 = vadd.f32 %v2517, %v2581
    %2583 = vmatmul.f32.gmra.mxu0 %v2403
    %v2584 = vpop.f32.mrf.mxu0
    %v2585 = vadd.f32 %v2520, %v2584
    %2586 = vmatmul.f32.gmra.mxu0 %v2406
    %v2587 = vpop.f32.mrf.mxu0
    %v2588 = vadd.f32 %v2523, %v2587
    %2589 = vmatmul.f32.gmra.mxu0 %v2409
    %v2590 = vpop.f32.mrf.mxu0
    %v2591 = vadd.f32 %v2526, %v2590
    %2592 = vmatmul.f32.gmra.mxu0 %v2412
    %v2593 = vpop.f32.mrf.mxu0
    %v2594 = vadd.f32 %v2529, %v2593
    %2595 = vmatmul.f32.gmra.mxu0 %v2415
    %v2596 = vpop.f32.mrf.mxu0
    %v2597 = vadd.f32 %v2532, %v2596
    %2598 = vmatmul.f32.gmra.mxu0 %v2418
    %v2599 = vpop.f32.mrf.mxu0
    %v2600 = vadd.f32 %v2535, %v2599
    %2601 = vmatmul.f32.gmra.mxu0 %v2421
    %v2602 = vpop.f32.mrf.mxu0
    %v2603 = vadd.f32 %v2538, %v2602
    %2604 = vmatmul.f32.gmra.mxu0 %v2424
    %v2605 = vpop.f32.mrf.mxu0
    %v2606 = vadd.f32 %v2541, %v2605
    %2607 = vmatmul.f32.gmra.mxu0 %v2427
    %v2608 = vpop.f32.mrf.mxu0
    %v2609 = vadd.f32 %v2544, %v2608
    %2610 = vmatmul.f32.gmra.mxu0 %v2430
    %v2611 = vpop.f32.mrf.mxu0
    %v2612 = vadd.f32 %v2547, %v2611
    %2613 = vmatmul.f32.gmra.mxu0 %v2433
    %v2614 = vpop.f32.mrf.mxu0
    %v2615 = vadd.f32 %v2550, %v2614
    %2616 = vmatmul.f32.gmra.mxu0 %v2436
    %v2617 = vpop.f32.mrf.mxu0
    %v2618 = vadd.f32 %v2553, %v2617
    %2619 = vdwg.mxu0
    %2620 = vmatpush.msra.mxu0 %v2485
    %2621 = vmatpush.msra.mxu0 %v2484
    %2622 = vmatpush.msra.mxu0 %v2483
    %2623 = vmatpush.msra.mxu0 %v2482
    %2624 = vmatpush.msra.mxu0 %v2481
    %2625 = vmatpush.msra.mxu0 %v2480
    %2626 = vmatpush.msra.mxu0 %v2479
    %2627 = vmatpush.msra.mxu0 %v2478
    %2628 = vmatpush.msra.mxu0 %v2477
    %2629 = vmatpush.msra.mxu0 %v2476
    %2630 = vmatpush.msra.mxu0 %v2475
    %2631 = vmatpush.msra.mxu0 %v2474
    %2632 = vmatpush.msra.mxu0 %v2473
    %2633 = vmatpush.msra.mxu0 %v2472
    %2634 = vmatpush.msra.mxu0 %v2471
    %2635 = vmatpush.msra.mxu0 %v2470
    %2636 = vmatmul.f32.gmra.mxu0 %v2392
    %v2637 = vpop.f32.mrf.mxu0
    %v2638 = vadd.f32 %v2573, %v2637
    %2639 = vmatmul.f32.gmra.mxu0 %v2395
    %v2640 = vpop.f32.mrf.mxu0
    %v2641 = vadd.f32 %v2576, %v2640
    %2642 = vmatmul.f32.gmra.mxu0 %v2398
    %v2643 = vpop.f32.mrf.mxu0
    %v2644 = vadd.f32 %v2579, %v2643
    %2645 = vmatmul.f32.gmra.mxu0 %v2401
    %v2646 = vpop.f32.mrf.mxu0
    %v2647 = vadd.f32 %v2582, %v2646
    %2648 = vmatmul.f32.gmra.mxu0 %v2404
    %v2649 = vpop.f32.mrf.mxu0
    %v2650 = vadd.f32 %v2585, %v2649
    %2651 = vmatmul.f32.gmra.mxu0 %v2407
    %v2652 = vpop.f32.mrf.mxu0
    %v2653 = vadd.f32 %v2588, %v2652
    %2654 = vmatmul.f32.gmra.mxu0 %v2410
    %v2655 = vpop.f32.mrf.mxu0
    %v2656 = vadd.f32 %v2591, %v2655
    %2657 = vmatmul.f32.gmra.mxu0 %v2413
    %v2658 = vpop.f32.mrf.mxu0
    %v2659 = vadd.f32 %v2594, %v2658
    %2660 = vmatmul.f32.gmra.mxu0 %v2416
    %v2661 = vpop.f32.mrf.mxu0
    %v2662 = vadd.f32 %v2597, %v2661
    %2663 = vmatmul.f32.gmra.mxu0 %v2419
    %v2664 = vpop.f32.mrf.mxu0
    %v2665 = vadd.f32 %v2600, %v2664
    %2666 = vmatmul.f32.gmra.mxu0 %v2422
    %v2667 = vpop.f32.mrf.mxu0
    %v2668 = vadd.f32 %v2603, %v2667
    %2669 = vmatmul.f32.gmra.mxu0 %v2425
    %v2670 = vpop.f32.mrf.mxu0
    %v2671 = vadd.f32 %v2606, %v2670
    %2672 = vmatmul.f32.gmra.mxu0 %v2428
    %v2673 = vpop.f32.mrf.mxu0
    %v2674 = vadd.f32 %v2609, %v2673
    %2675 = vmatmul.f32.gmra.mxu0 %v2431
    %v2676 = vpop.f32.mrf.mxu0
    %v2677 = vadd.f32 %v2612, %v2676
    %2678 = vmatmul.f32.gmra.mxu0 %v2434
    %v2679 = vpop.f32.mrf.mxu0
    %v2680 = vadd.f32 %v2615, %v2679
    %2681 = vmatmul.f32.gmra.mxu0 %v2437
    %v2682 = vpop.f32.mrf.mxu0
    %v2683 = vadd.f32 %v2618, %v2682
    %2684 = vdwg.mxu0
    %vm2685 = vcmp.ge.f32.partialorder %v2638, 0.0
    %vm2686 = vcmp.ge.f32.partialorder %v2641, 0.0
    %vm2687 = vcmp.ge.f32.partialorder %v2644, 0.0
    %vm2688 = vcmp.ge.f32.partialorder %v2647, 0.0
    %vm2689 = vcmp.ge.f32.partialorder %v2650, 0.0
    %vm2690 = vcmp.ge.f32.partialorder %v2653, 0.0
    %vm2691 = vcmp.ge.f32.partialorder %v2656, 0.0
    %vm2692 = vcmp.ge.f32.partialorder %v2659, 0.0
    %vm2693 = vcmp.ge.f32.partialorder %v2662, 0.0
    %vm2694 = vcmp.ge.f32.partialorder %v2665, 0.0
    %vm2695 = vcmp.ge.f32.partialorder %v2668, 0.0
    %vm2696 = vcmp.ge.f32.partialorder %v2671, 0.0
    %vm2697 = vcmp.ge.f32.partialorder %v2674, 0.0
    %vm2698 = vcmp.ge.f32.partialorder %v2677, 0.0
    %vm2699 = vcmp.ge.f32.partialorder %v2680, 0.0
    %vm2700 = vcmp.ge.f32.partialorder %v2683, 0.0
    %v2701 = vstv %s70
    %v2702 = vmul.f32 %v2701, %v2638
    %v2703 = vmul.f32 %v2701, %v2641
    %v2704 = vmul.f32 %v2701, %v2644
    %v2705 = vmul.f32 %v2701, %v2647
    %v2706 = vmul.f32 %v2701, %v2650
    %v2707 = vmul.f32 %v2701, %v2653
    %v2708 = vmul.f32 %v2701, %v2656
    %v2709 = vmul.f32 %v2701, %v2659
    %v2710 = vmul.f32 %v2701, %v2662
    %v2711 = vmul.f32 %v2701, %v2665
    %v2712 = vmul.f32 %v2701, %v2668
    %v2713 = vmul.f32 %v2701, %v2671
    %v2714 = vmul.f32 %v2701, %v2674
    %v2715 = vmul.f32 %v2701, %v2677
    %v2716 = vmul.f32 %v2701, %v2680
    %v2717 = vmul.f32 %v2701, %v2683
    %v2718 = vsel %vm2685, %v2638, %v2702
    %v2719 = vsel %vm2686, %v2641, %v2703
    %v2720 = vsel %vm2687, %v2644, %v2704
    %v2721 = vsel %vm2688, %v2647, %v2705
    %v2722 = vsel %vm2689, %v2650, %v2706
    %v2723 = vsel %vm2690, %v2653, %v2707
    %v2724 = vsel %vm2691, %v2656, %v2708
    %v2725 = vsel %vm2692, %v2659, %v2709
    %v2726 = vsel %vm2693, %v2662, %v2710
    %v2727 = vsel %vm2694, %v2665, %v2711
    %v2728 = vsel %vm2695, %v2668, %v2712
    %v2729 = vsel %vm2696, %v2671, %v2713
    %v2730 = vsel %vm2697, %v2674, %v2714
    %v2731 = vsel %vm2698, %v2677, %v2715
    %v2732 = vsel %vm2699, %v2680, %v2716
    %v2733 = vsel %vm2700, %v2683, %v2717
    %v2734 = vld [vmem:[%s7] sm:$0x1]
    %v2735 = vld [vmem:[#allocation2] sm:$0x1]
    %2737 = vset.pattern.permute.xlu0 0
    %2738 = vperm.xlu0 %2737, %v2735
    %v2739 = vpop.permute.xlu0 %2738
    %v2741 = vperm.slane %v2739, 0
    %vm2742 = vcmask 64512
    %v2744 = vsel %vm2742, %v2734, 0
    %v2747 = vsel %vm2742, %v2718, 0
    %v2750 = vsel %vm2742, %v2719, 0
    %v2753 = vsel %vm2742, %v2720, 0
    %v2756 = vsel %vm2742, %v2721, 0
    %v2759 = vsel %vm2742, %v2722, 0
    %v2762 = vsel %vm2742, %v2723, 0
    %v2765 = vsel %vm2742, %v2724, 0
    %v2768 = vsel %vm2742, %v2725, 0
    %v2771 = vsel %vm2742, %v2726, 0
    %v2774 = vsel %vm2742, %v2727, 0
    %v2777 = vsel %vm2742, %v2728, 0
    %v2780 = vsel %vm2742, %v2729, 0
    %v2783 = vsel %vm2742, %v2730, 0
    %v2786 = vsel %vm2742, %v2731, 0
    %v2789 = vsel %vm2742, %v2732, 0
    %v2792 = vsel %vm2742, %v2733, 0
    %2794 = vmatpush.xpose.msra.mxu0 %v2792
    %2795 = vmatpush.xpose.msra.mxu0 %v2789
    %2796 = vmatpush.xpose.msra.mxu0 %v2786
    %2797 = vmatpush.xpose.msra.mxu0 %v2783
    %2798 = vmatpush.xpose.msra.mxu0 %v2780
    %2799 = vmatpush.xpose.msra.mxu0 %v2777
    %2800 = vmatpush.xpose.msra.mxu0 %v2774
    %2801 = vmatpush.xpose.msra.mxu0 %v2771
    %2802 = vmatpush.xpose.msra.mxu0 %v2768
    %2803 = vmatpush.xpose.msra.mxu0 %v2765
    %2804 = vmatpush.xpose.msra.mxu0 %v2762
    %2805 = vmatpush.xpose.msra.mxu0 %v2759
    %2806 = vmatpush.xpose.msra.mxu0 %v2756
    %2807 = vmatpush.xpose.msra.mxu0 %v2753
    %2808 = vmatpush.xpose.msra.mxu0 %v2750
    %2809 = vmatpush.xpose.msra.mxu0 %v2747
    %2810 = vmatmul.f32.gmra.mxu0 %v2744
    %v2811 = vpop.f32.mrf.mxu0
    %v2812 = vadd.f32 %v2741, %v2811
    %2813 = vdwg.mxu0
    %2814 = vst [vmem:[#allocation8] sm:$0x1] %v2812
    // Predicated region
    $region50: #{tpu_custom_call.1} parent=1 // pred_check
      _
    $region51: #{tpu_custom_call.1} parent=1 // pred_check_branch
      %2816 = sbr.rel (0) target = $region53
    $region52: #{tpu_custom_call.1} parent=1 // pred_region
      %2818 = vsyncadd [#allocation5], 0
      %s2820 = sshll.u32 [#allocation8], 4
      %s2821 = int_to_ptr.vmem [resolvable:$true] %s2820
      %s2822 = sshll.u32 %s10, 4
      %s2823 = int_to_ptr.hbm [resolvable:$true] %s2822
      %2825 = dma.vmem_to_hbm [thread:$0]  %s2821, 16, %s2823, [#allocation5]
    $region53: #{tpu_custom_call.1} parent=1 // pred_fallthru
      _
    // Predicated region
    $region54: #{tpu_custom_call.1} parent=1 // pred_check
      _
    $region55: #{tpu_custom_call.1} parent=1 // pred_check_branch
      %2827 = sbr.rel (0) target = $region57
    $region56: #{tpu_custom_call.1} parent=1 // pred_region
      %2829 = dma.done [#allocation5], 16
    $region57: #{tpu_custom_call.1} parent=1 // pred_fallthru
      _
    %2830 = vsyncpa [#allocation4], 1
    %2831 = vsyncpa [#allocation5], 1
    %2832 = vsyncpa [#allocation6], 1

</llo_original>
